<compile_context>
chip_gen: v5e
topology: v5e:2x2
jax: 0.10.0
libtpu: 0.0.40
codegen_flags: <defaults>
</compile_context>

<pallas_src>
import math
import functools

import jax
import jax.numpy as jnp
from jax.experimental import pallas as pl
from jax.experimental.pallas import tpu as pltpu


def actor_kernel(state_ref, eps_ref,
                 w1_ref, b1_ref, w2_ref, b2_ref, w3_ref, b3_ref,
                 w4_ref, b4_ref,
                 out_ref, *, action_dim):
    x = state_ref[...]

    def dense(h, w_ref, b_ref):
        w = w_ref[...]
        # Cast activations to the weight dtype (no-op for f32; bf16 for the
        # optional reduced-precision MXU path).  Accumulate in f32.
        return jnp.dot(h.astype(w.dtype), w,
                       preferred_element_type=jnp.float32) + b_ref[...]

    h = jnp.maximum(dense(x, w1_ref, b1_ref), 0.0)
    h = jnp.maximum(dense(h, w2_ref, b2_ref), 0.0)
    h = jnp.maximum(dense(h, w3_ref, b3_ref), 0.0)

    # Single (hidden, 2A) matmul, slice mu / logstd in-register.
    mu_logstd = dense(h, w4_ref, b4_ref)
    A = action_dim
    mu = mu_logstd[:, :A]
    logstd = jnp.clip(mu_logstd[:, A:2 * A], -20.0, 2.0)
    std = jnp.exp(logstd)

    eps = eps_ref[...]
    pre_tanh = mu + std * eps              # Normal(mu, std).rsample()
    action = jnp.tanh(pre_tanh)            # TanhTransform

    # log_prob of the transformed distribution, summed over the action dim.
    # Normal log-prob at the pre-tanh sample: (x - mu)/std == eps.
    normal_lp = -0.5 * eps * eps - logstd - 0.5 * math.log(2.0 * math.pi)
    # TanhTransform.log_abs_det_jacobian(x, y) = 2*(log2 - x - softplus(-2x))
    two_x = 2.0 * pre_tanh
    softplus_m2x = jnp.maximum(-two_x, 0.0) + jnp.log1p(jnp.exp(-jnp.abs(two_x)))
    log_det = 2.0 * (math.log(2.0) - pre_tanh - softplus_m2x)
    lp = jnp.sum(normal_lp - log_det, axis=1, keepdims=True)

    # Pack everything into one lane-dense output slab:
    #   [:, 0:A)      action
    #   [:, A:2A)     mean = tanh(mu)
    #   [:, 2A:2A+1)  logprob
    #   [:, 2A+1:)    zero padding (keeps the output block 128 lanes wide)
    out_ref[...] = jnp.zeros(out_ref.shape, out_ref.dtype)
    out_ref[:, :A] = action
    out_ref[:, A:2 * A] = jnp.tanh(mu)
    out_ref[:, 2 * A:2 * A + 1] = lp


def stochastic_actor_forward(state, eps, params, *, block_b=128,
                             matmul_dtype=jnp.float32, out_width=128):
    """Full actor forward (get_logprob=True, get_mean=True).

    Returns (action, logprob, mean), matching the PyTorch module.
    """
    B, S = state.shape
    A = eps.shape[1]
    assert out_width % 128 == 0 and out_width >= 2 * A + 1

    # Batch tile: multiple of 8 sublanes; pad batch to a multiple of the tile.
    tb = max(8, min(block_b, ((B + 7) // 8) * 8))
    tb = ((tb + 7) // 8) * 8
    b_pad = ((B + tb - 1) // tb) * tb
    if b_pad != B:
        state = jnp.pad(state, ((0, b_pad - B), (0, 0)))
        eps = jnp.pad(eps, ((0, b_pad - B), (0, 0)))

    if matmul_dtype != jnp.float32:
        cast_w = lambda w: w.astype(matmul_dtype)   # halve weight DMA bytes (v6e/v7x)
    else:
        cast_w = lambda w: w

    args = (state, eps,
            cast_w(params["w1"]), params["b1"],
            cast_w(params["w2"]), params["b2"],
            cast_w(params["w3"]), params["b3"],
            cast_w(params["w4"]), params["b4"])

    def resident(a):
        # Full-array block with a constant index_map: stays VMEM-resident
        # across all grid steps (weights/biases loaded once).
        return pl.BlockSpec(a.shape, lambda i: (0, 0))

    in_specs = [
        pl.BlockSpec((tb, S), lambda i: (i, 0)),   # state  (batch-tiled)
        pl.BlockSpec((tb, A), lambda i: (i, 0)),   # eps    (batch-tiled)
    ] + [resident(a) for a in args[2:]]

    out = pl.pallas_call(
        functools.partial(actor_kernel, action_dim=A),
        out_shape=jax.ShapeDtypeStruct((b_pad, out_width), jnp.float32),
        grid=(b_pad // tb,),
        in_specs=in_specs,
        out_specs=pl.BlockSpec((tb, out_width), lambda i: (i, 0)),
        compiler_params=pltpu.CompilerParams(
            dimension_semantics=("parallel",)),   # megacore sharding on v7x
    )(*args)

    action = out[:B, :A]
    logprob = out[:B, 2 * A:2 * A + 1]
    mean = out[:B, A:2 * A]
    return action, logprob, mean


def init_params(key, state_dim, action_dim, hidden_dim):
    """Deterministic init mimicking nn.Linear's U(-1/sqrt(fan_in), 1/sqrt(fan_in))."""
    def linear(k, fan_in, fan_out):
        kw, kb = jax.random.split(k)
        bound = 1.0 / math.sqrt(fan_in)
        w = jax.random.uniform(kw, (fan_in, fan_out), jnp.float32, -bound, bound)
        b = jax.random.uniform(kb, (1, fan_out), jnp.float32, -bound, bound)
        return w, b

    k1, k2, k3, k4 = jax.random.split(key, 4)
    w1, b1 = linear(k1, state_dim, hidden_dim)
    w2, b2 = linear(k2, hidden_dim, hidden_dim)
    w3, b3 = linear(k3, hidden_dim, hidden_dim)
    w4, b4 = linear(k4, hidden_dim, 2 * action_dim)   # single merged layer 4
    return {"w1": w1, "b1": b1, "w2": w2, "b2": b2,
            "w3": w3, "b3": b3, "w4": w4, "b4": b4}


def reference_forward(state, eps, p):
    """Pure-JAX reference for verification."""
    A = eps.shape[1]
    h1 = jax.nn.relu(state @ p["w1"] + p["b1"])
    h2 = jax.nn.relu(h1 @ p["w2"] + p["b2"])
    h3 = jax.nn.relu(h2 @ p["w3"] + p["b3"])
    mu_logstd = h3 @ p["w4"] + p["b4"]
    mu = mu_logstd[:, :A]
    logstd = jnp.clip(mu_logstd[:, A:], -20.0, 2.0)
    std = jnp.exp(logstd)
    x = mu + std * eps
    action = jnp.tanh(x)
    normal_lp = -0.5 * eps * eps - logstd - 0.5 * math.log(2.0 * math.pi)
    log_det = 2.0 * (math.log(2.0) - x - jax.nn.softplus(-2.0 * x))
    logprob = jnp.sum(normal_lp - log_det, axis=1, keepdims=True)
    return action, logprob, jnp.tanh(mu)


if __name__ == "__main__":
    STATE_DIM, ACTION_DIM, HIDDEN_DIM = 16, 8, 128

    key = jax.random.PRNGKey(0)
    k_params, k_data = jax.random.split(key)
    params = init_params(k_params, STATE_DIM, ACTION_DIM, HIDDEN_DIM)

    # TODO(synk): eps could be generated in-kernel via pltpu.prng_seed /
    # prng_random_bits; kept as an explicit input for deterministic verification.
    for B in (256, 20):   # tile-aligned batch and ragged (padded) batch
        ks, ke = jax.random.split(jax.random.fold_in(k_data, B))
        state = jax.random.normal(ks, (B, STATE_DIM), jnp.float32)
        eps = jax.random.normal(ke, (B, ACTION_DIM), jnp.float32)

        action, logprob, mean = stochastic_actor_forward(
            state, eps, params, block_b=128)
        jax.block_until_ready((action, logprob, mean))

        a_ref, lp_ref, m_ref = reference_forward(state, eps, params)
        assert jnp.allclose(action, a_ref, rtol=1e-5, atol=1e-5)
        assert jnp.allclose(logprob, lp_ref, rtol=1e-4, atol=2e-4)
        assert jnp.allclose(mean, m_ref, rtol=1e-5, atol=1e-5)

    print("KERNEL_OK")
</pallas_src>

<mosaic_0001>
module attributes {stable_mosaic.version = 11 : i64} {
  func.func @actor_kernel(%arg0: i32, %arg1: memref<128x16xf32, #tpu.memory_space<vmem>>, %arg2: memref<128x8xf32, #tpu.memory_space<vmem>>, %arg3: memref<16x128xf32, #tpu.memory_space<vmem>>, %arg4: memref<1x128xf32, #tpu.memory_space<vmem>>, %arg5: memref<128x128xf32, #tpu.memory_space<vmem>>, %arg6: memref<1x128xf32, #tpu.memory_space<vmem>>, %arg7: memref<128x128xf32, #tpu.memory_space<vmem>>, %arg8: memref<1x128xf32, #tpu.memory_space<vmem>>, %arg9: memref<128x16xf32, #tpu.memory_space<vmem>>, %arg10: memref<1x16xf32, #tpu.memory_space<vmem>>, %arg11: memref<128x128xf32, #tpu.memory_space<vmem>>) attributes {dimension_semantics = [#tpu.dimension_semantics<parallel>], iteration_bounds = array<i64: 2>, scalar_prefetch = 0 : i64, scratch_operands = 0 : i64, tpu.core_type = #tpu.core_type<tc>, window_params = [{transform_indices = @transform_0, window_bounds = array<i64: 128, 16>}, {transform_indices = @transform_1, window_bounds = array<i64: 128, 8>}, {pipeline_mode = #tpu.pipeline_mode<synchronous>, transform_indices = @transform_2, window_bounds = array<i64: 16, 128>}, {pipeline_mode = #tpu.pipeline_mode<synchronous>, transform_indices = @transform_3, window_bounds = array<i64: 1, 128>}, {pipeline_mode = #tpu.pipeline_mode<synchronous>, transform_indices = @transform_4, window_bounds = array<i64: 128, 128>}, {pipeline_mode = #tpu.pipeline_mode<synchronous>, transform_indices = @transform_5, window_bounds = array<i64: 1, 128>}, {pipeline_mode = #tpu.pipeline_mode<synchronous>, transform_indices = @transform_6, window_bounds = array<i64: 128, 128>}, {pipeline_mode = #tpu.pipeline_mode<synchronous>, transform_indices = @transform_7, window_bounds = array<i64: 1, 128>}, {pipeline_mode = #tpu.pipeline_mode<synchronous>, transform_indices = @transform_8, window_bounds = array<i64: 128, 16>}, {pipeline_mode = #tpu.pipeline_mode<synchronous>, transform_indices = @transform_9, window_bounds = array<i64: 1, 16>}, {transform_indices = @transform_10, window_bounds = array<i64: 128, 128>}]} {
    %c0 = arith.constant 0 : index
    %c0_0 = arith.constant 0 : index
    %0 = vector.load %arg1[%c0, %c0_0] : memref<128x16xf32, #tpu.memory_space<vmem>>, vector<128x16xf32>
    %c0_1 = arith.constant 0 : index
    %c0_2 = arith.constant 0 : index
    %1 = vector.load %arg3[%c0_1, %c0_2] : memref<16x128xf32, #tpu.memory_space<vmem>>, vector<16x128xf32>
    %cst = arith.constant dense<0.000000e+00> : vector<128x128xf32>
    %2 = tpu.matmul %0, %1, %cst {dimension_numbers = #tpu.dot_dimension_numbers<[1], [0], [0], [1], [0, 0, 1, 1], [], []>} : vector<128x16xf32>, vector<16x128xf32>, vector<128x128xf32> -> vector<128x128xf32>
    %c0_3 = arith.constant 0 : index
    %c0_4 = arith.constant 0 : index
    %3 = vector.load %arg4[%c0_3, %c0_4] : memref<1x128xf32, #tpu.memory_space<vmem>>, vector<1x128xf32>
    %4 = vector.broadcast %3 : vector<1x128xf32> to vector<128x128xf32>
    %5 = arith.addf %2, %4 : vector<128x128xf32>
    %cst_5 = arith.constant 0.000000e+00 : f32
    %6 = vector.broadcast %cst_5 : f32 to vector<128x128xf32>
    %7 = arith.maximumf %5, %6 : vector<128x128xf32>
    %c0_6 = arith.constant 0 : index
    %c0_7 = arith.constant 0 : index
    %8 = vector.load %arg5[%c0_6, %c0_7] : memref<128x128xf32, #tpu.memory_space<vmem>>, vector<128x128xf32>
    %cst_8 = arith.constant dense<0.000000e+00> : vector<128x128xf32>
    %9 = tpu.matmul %7, %8, %cst_8 {dimension_numbers = #tpu.dot_dimension_numbers<[1], [0], [0], [1], [0, 0, 1, 1], [], []>} : vector<128x128xf32>, vector<128x128xf32>, vector<128x128xf32> -> vector<128x128xf32>
    %c0_9 = arith.constant 0 : index
    %c0_10 = arith.constant 0 : index
    %10 = vector.load %arg6[%c0_9, %c0_10] : memref<1x128xf32, #tpu.memory_space<vmem>>, vector<1x128xf32>
    %11 = vector.broadcast %10 : vector<1x128xf32> to vector<128x128xf32>
    %12 = arith.addf %9, %11 : vector<128x128xf32>
    %cst_11 = arith.constant 0.000000e+00 : f32
    %13 = vector.broadcast %cst_11 : f32 to vector<128x128xf32>
    %14 = arith.maximumf %12, %13 : vector<128x128xf32>
    %c0_12 = arith.constant 0 : index
    %c0_13 = arith.constant 0 : index
    %15 = vector.load %arg7[%c0_12, %c0_13] : memref<128x128xf32, #tpu.memory_space<vmem>>, vector<128x128xf32>
    %cst_14 = arith.constant dense<0.000000e+00> : vector<128x128xf32>
    %16 = tpu.matmul %14, %15, %cst_14 {dimension_numbers = #tpu.dot_dimension_numbers<[1], [0], [0], [1], [0, 0, 1, 1], [], []>} : vector<128x128xf32>, vector<128x128xf32>, vector<128x128xf32> -> vector<128x128xf32>
    %c0_15 = arith.constant 0 : index
    %c0_16 = arith.constant 0 : index
    %17 = vector.load %arg8[%c0_15, %c0_16] : memref<1x128xf32, #tpu.memory_space<vmem>>, vector<1x128xf32>
    %18 = vector.broadcast %17 : vector<1x128xf32> to vector<128x128xf32>
    %19 = arith.addf %16, %18 : vector<128x128xf32>
    %cst_17 = arith.constant 0.000000e+00 : f32
    %20 = vector.broadcast %cst_17 : f32 to vector<128x128xf32>
    %21 = arith.maximumf %19, %20 : vector<128x128xf32>
    %c0_18 = arith.constant 0 : index
    %c0_19 = arith.constant 0 : index
    %22 = vector.load %arg9[%c0_18, %c0_19] : memref<128x16xf32, #tpu.memory_space<vmem>>, vector<128x16xf32>
    %cst_20 = arith.constant dense<0.000000e+00> : vector<128x16xf32>
    %23 = tpu.matmul %21, %22, %cst_20 {dimension_numbers = #tpu.dot_dimension_numbers<[1], [0], [0], [1], [0, 0, 1, 1], [], []>} : vector<128x128xf32>, vector<128x16xf32>, vector<128x16xf32> -> vector<128x16xf32>
    %c0_21 = arith.constant 0 : index
    %c0_22 = arith.constant 0 : index
    %24 = vector.load %arg10[%c0_21, %c0_22] : memref<1x16xf32, #tpu.memory_space<vmem>>, vector<1x16xf32>
    %25 = vector.broadcast %24 : vector<1x16xf32> to vector<128x16xf32>
    %26 = arith.addf %23, %25 : vector<128x16xf32>
    %27 = vector.extract_strided_slice %26 {offsets = [0, 0], sizes = [128, 8], strides = [1, 1]} : vector<128x16xf32> to vector<128x8xf32>
    %28 = vector.extract_strided_slice %26 {offsets = [0, 8], sizes = [128, 8], strides = [1, 1]} : vector<128x16xf32> to vector<128x8xf32>
    %cst_23 = arith.constant -2.000000e+01 : f32
    %cst_24 = arith.constant 2.000000e+00 : f32
    %29 = vector.broadcast %cst_23 : f32 to vector<128x8xf32>
    %30 = arith.maximumf %29, %28 : vector<128x8xf32>
    %31 = vector.broadcast %cst_24 : f32 to vector<128x8xf32>
    %32 = arith.minimumf %31, %30 : vector<128x8xf32>
    %33 = math.exp %32 : vector<128x8xf32>
    %c0_25 = arith.constant 0 : index
    %c0_26 = arith.constant 0 : index
    %34 = vector.load %arg2[%c0_25, %c0_26] : memref<128x8xf32, #tpu.memory_space<vmem>>, vector<128x8xf32>
    %35 = arith.mulf %33, %34 : vector<128x8xf32>
    %36 = arith.addf %27, %35 : vector<128x8xf32>
    %37 = math.tanh %36 : vector<128x8xf32>
    %cst_27 = arith.constant -5.000000e-01 : f32
    %38 = vector.broadcast %cst_27 : f32 to vector<128x8xf32>
    %39 = arith.mulf %38, %34 : vector<128x8xf32>
    %40 = arith.mulf %39, %34 : vector<128x8xf32>
    %41 = arith.subf %40, %32 : vector<128x8xf32>
    %cst_28 = arith.constant 0.918938517 : f32
    %42 = vector.broadcast %cst_28 : f32 to vector<128x8xf32>
    %43 = arith.subf %41, %42 : vector<128x8xf32>
    %cst_29 = arith.constant 2.000000e+00 : f32
    %44 = vector.broadcast %cst_29 : f32 to vector<128x8xf32>
    %45 = arith.mulf %44, %36 : vector<128x8xf32>
    %cst_30 = arith.constant 0.000000e+00 : f32
    %46 = vector.broadcast %cst_30 : f32 to vector<128x8xf32>
    %47 = arith.subf %46, %45 : vector<128x8xf32>
    %cst_31 = arith.constant 0.000000e+00 : f32
    %48 = vector.broadcast %cst_31 : f32 to vector<128x8xf32>
    %49 = arith.maximumf %47, %48 : vector<128x8xf32>
    %50 = math.absf %45 : vector<128x8xf32>
    %cst_32 = arith.constant 0.000000e+00 : f32
    %51 = vector.broadcast %cst_32 : f32 to vector<128x8xf32>
    %52 = arith.subf %51, %50 : vector<128x8xf32>
    %53 = math.exp %52 : vector<128x8xf32>
    %54 = math.log1p %53 : vector<128x8xf32>
    %55 = arith.addf %49, %54 : vector<128x8xf32>
    %cst_33 = arith.constant 0.693147182 : f32
    %56 = vector.broadcast %cst_33 : f32 to vector<128x8xf32>
    %57 = arith.subf %56, %36 : vector<128x8xf32>
    %58 = arith.subf %57, %55 : vector<128x8xf32>
    %cst_34 = arith.constant 2.000000e+00 : f32
    %59 = vector.broadcast %cst_34 : f32 to vector<128x8xf32>
    %60 = arith.mulf %59, %58 : vector<128x8xf32>
    %61 = arith.subf %43, %60 : vector<128x8xf32>
    %cst_35 = arith.constant dense<0.000000e+00> : vector<128xf32>
    %62 = vector.multi_reduction <add>, %61, %cst_35 [1] : vector<128x8xf32> to vector<128xf32>
    %63 = vector.shape_cast %62 : vector<128xf32> to vector<128x1xf32>
    %cst_36 = arith.constant 0.000000e+00 : f32
    %64 = vector.broadcast %cst_36 : f32 to vector<128x128xf32>
    %c0_37 = arith.constant 0 : index
    %c0_38 = arith.constant 0 : index
    %65 = vector.load %arg11[%c0_37, %c0_38] : memref<128x128xf32, #tpu.memory_space<vmem>>, vector<128x128xf32>
    tpu.vector_store %arg11[%c0_37, %c0_38], %64 {strides = array<i32>} : memref<128x128xf32, #tpu.memory_space<vmem>>, vector<128x128xf32>,
    %c0_39 = arith.constant 0 : index
    %c0_40 = arith.constant 0 : index
    %66 = vector.load %arg11[%c0_39, %c0_40] : memref<128x128xf32, #tpu.memory_space<vmem>>, vector<128x8xf32>
    tpu.vector_store %arg11[%c0_39, %c0_40], %37 {strides = array<i32>} : memref<128x128xf32, #tpu.memory_space<vmem>>, vector<128x8xf32>,
    %67 = math.tanh %27 : vector<128x8xf32>
    %c0_41 = arith.constant 0 : index
    %c8 = arith.constant 8 : index
    %68 = vector.load %arg11[%c0_41, %c8] : memref<128x128xf32, #tpu.memory_space<vmem>>, vector<128x8xf32>
    tpu.vector_store %arg11[%c0_41, %c8], %67 {strides = array<i32>} : memref<128x128xf32, #tpu.memory_space<vmem>>, vector<128x8xf32>,
    %c0_42 = arith.constant 0 : index
    %c16 = arith.constant 16 : index
    %69 = vector.load %arg11[%c0_42, %c16] : memref<128x128xf32, #tpu.memory_space<vmem>>, vector<128x1xf32>
    tpu.vector_store %arg11[%c0_42, %c16], %63 {strides = array<i32>} : memref<128x128xf32, #tpu.memory_space<vmem>>, vector<128x1xf32>,
    return
  }
  func.func @transform_0(%arg0: i32) -> (i32, i32) {
    %c0_i32 = arith.constant 0 : i32
    %c0_i32_0 = arith.constant 0 : i32
    return %arg0, %c0_i32 : i32, i32
  }
  func.func @transform_1(%arg0: i32) -> (i32, i32) {
    %c0_i32 = arith.constant 0 : i32
    %c0_i32_0 = arith.constant 0 : i32
    return %arg0, %c0_i32 : i32, i32
  }
  func.func @transform_2(%arg0: i32) -> (i32, i32) {
    %c0_i32 = arith.constant 0 : i32
    %c0_i32_0 = arith.constant 0 : i32
    %c0_i32_1 = arith.constant 0 : i32
    return %c0_i32, %c0_i32_0 : i32, i32
  }
  func.func @transform_3(%arg0: i32) -> (i32, i32) {
    %c0_i32 = arith.constant 0 : i32
    %c0_i32_0 = arith.constant 0 : i32
    %c0_i32_1 = arith.constant 0 : i32
    return %c0_i32, %c0_i32_0 : i32, i32
  }
  func.func @transform_4(%arg0: i32) -> (i32, i32) {
    %c0_i32 = arith.constant 0 : i32
    %c0_i32_0 = arith.constant 0 : i32
    %c0_i32_1 = arith.constant 0 : i32
    return %c0_i32, %c0_i32_0 : i32, i32
  }
  func.func @transform_5(%arg0: i32) -> (i32, i32) {
    %c0_i32 = arith.constant 0 : i32
    %c0_i32_0 = arith.constant 0 : i32
    %c0_i32_1 = arith.constant 0 : i32
    return %c0_i32, %c0_i32_0 : i32, i32
  }
  func.func @transform_6(%arg0: i32) -> (i32, i32) {
    %c0_i32 = arith.constant 0 : i32
    %c0_i32_0 = arith.constant 0 : i32
    %c0_i32_1 = arith.constant 0 : i32
    return %c0_i32, %c0_i32_0 : i32, i32
  }
  func.func @transform_7(%arg0: i32) -> (i32, i32) {
    %c0_i32 = arith.constant 0 : i32
    %c0_i32_0 = arith.constant 0 : i32
    %c0_i32_1 = arith.constant 0 : i32
    return %c0_i32, %c0_i32_0 : i32, i32
  }
  func.func @transform_8(%arg0: i32) -> (i32, i32) {
    %c0_i32 = arith.constant 0 : i32
    %c0_i32_0 = arith.constant 0 : i32
    %c0_i32_1 = arith.constant 0 : i32
    return %c0_i32, %c0_i32_0 : i32, i32
  }
  func.func @transform_9(%arg0: i32) -> (i32, i32) {
    %c0_i32 = arith.constant 0 : i32
    %c0_i32_0 = arith.constant 0 : i32
    %c0_i32_1 = arith.constant 0 : i32
    return %c0_i32, %c0_i32_0 : i32, i32
  }
  func.func @transform_10(%arg0: i32) -> (i32, i32) {
    %c0_i32 = arith.constant 0 : i32
    %c0_i32_0 = arith.constant 0 : i32
    return %arg0, %c0_i32 : i32, i32
  }
}

</mosaic_0001>

<llo_original>
// kernel: tpu_custom_call.1
$region0: #{tpu_custom_call.1}
  #allocation0 [shape = 'u32[]', space=smem, size = 0x4, offset = 0x4, fixed_abs, tag = 'smem constant byte address 0x4 - core index']
  #allocation1 [shape = 'u32[72,128]{1,0:T(1,128)}', space=vmem, size = 0x9000, scoped, tag = 'internal scratch']
  %s0 = inlined_call_operand.vmem [shape: f32[256,16], index: 0, kind: input, shape index: {}]
  %s1 = inlined_call_operand.vmem [shape: f32[256,8], index: 1, kind: input, shape index: {}]
  %s2 = inlined_call_operand.vmem [shape: f32[16,128], index: 2, kind: input, shape index: {}]
  %s3 = inlined_call_operand.vmem [shape: f32[1,128], index: 3, kind: input, shape index: {}]
  %s4 = inlined_call_operand.vmem [shape: f32[128,128], index: 4, kind: input, shape index: {}]
  %s5 = inlined_call_operand.vmem [shape: f32[1,128], index: 5, kind: input, shape index: {}]
  %s6 = inlined_call_operand.vmem [shape: f32[128,128], index: 6, kind: input, shape index: {}]
  %s7 = inlined_call_operand.vmem [shape: f32[1,128], index: 7, kind: input, shape index: {}]
  %s8 = inlined_call_operand.vmem [shape: f32[128,16], index: 8, kind: input, shape index: {}]
  %s9 = inlined_call_operand.vmem [shape: f32[1,16], index: 9, kind: input, shape index: {}]
  %s10 = inlined_call_operand.hbm [shape: f32[256,128], index: 10, kind: output, shape index: {}]
  %s11 = sld [smem:[#allocation0]]
  $region73: #{tpu_custom_call.1} parent=0
    _
  %s13 = ssub.s32 1, %s11
  %s14 = scalar_select 0, %s13, %s11
  $region1: #{tpu_custom_call.1} parent=0
    #allocation2 [shape = 'u8[131072]{0}', space=vmem, size = 0x20000, scoped, tag = 'output window, operand 0']
    #allocation3 [shape = 's32[2]{0}', space=sflag, size = 0x8, scoped, tag = 'scoped memory for tpu_custom_call.1']
    %15 = vsyncpa [#allocation3], 0
    %s16 = scalar_lea.sflag [#allocation3], 1
    %17 = vsyncpa %s16, 0
    loop: start=0, step=1, limit=4
    $region2: #{tpu_custom_call.1} parent=1 // loop_pre_header
      _
    $region3: #{tpu_custom_call.1} parent=1 // loop_header
      %s19 = sphi 0, %s23
      %p20 = scmp.ge.s32.totalorder %s19, 4
      %s29 = sphi 0, %s31
      %s32 = sphi 0, %s29
      %s33 = sphi 0, %s32
      %s49 = sphi 0, %s33
      %s55 = sphi 0, %s57
      %s58 = sphi 0, %s55
      %s59 = sphi 0, %s58
      %s75 = sphi 0, %s59
      %s79 = sphi 0, %s79
      %s81 = sphi 0, %s79
      %s82 = sphi 0, %s81
      %s96 = sphi 0, %s82
      %s100 = sphi 0, %s100
      %s102 = sphi 0, %s100
      %s103 = sphi 0, %s102
      %s117 = sphi 0, %s103
      %s121 = sphi 0, %s121
      %s123 = sphi 0, %s121
      %s124 = sphi 0, %s123
      %s138 = sphi 0, %s124
      %s142 = sphi 0, %s142
      %s144 = sphi 0, %s142
      %s145 = sphi 0, %s144
      %s159 = sphi 0, %s145
      %s163 = sphi 0, %s163
      %s165 = sphi 0, %s163
      %s166 = sphi 0, %s165
      %s180 = sphi 0, %s166
      %s184 = sphi 0, %s184
      %s186 = sphi 0, %s184
      %s187 = sphi 0, %s186
      %s201 = sphi 0, %s187
      %s205 = sphi 0, %s205
      %s207 = sphi 0, %s205
      %s208 = sphi 0, %s207
      %s222 = sphi 0, %s208
      %s226 = sphi 0, %s226
      %s228 = sphi 0, %s226
      %s229 = sphi 0, %s228
      %s243 = sphi 0, %s229
      %s249 = sphi 0, %s251
      %s252 = sphi 0, %s249
      %s253 = sphi 0, %s252
      %s269 = sphi 0, %s253
    $region4: #{tpu_custom_call.1} parent=1 // loop_header_branch
      %22 = sbr.rel (%p20) target = $region8
    $region5: #{tpu_custom_call.1} parent=1 // loop_body
      %s24 = ssub.s32 %s19, 1
      %s25 = ssub.s32 %s19, 2
      %s26 = sadd.s32 %s19, 1
      %s27 = ssub.s32 %s19, %s26
      %p28 = scmp.eq.s32.totalorder %s27, 0
      %s30 = sadd.s32 %s29, 1
      %s31 = scalar_select %p28, %s29, %s30
      %p34 = pneg %p28
      %p35 = scmp.eq.s32.totalorder %s19, 1
      %p36 = por %p34, %p35
      %p37 = scmp.ne.s32.totalorder %s29, %s32
      %p38 = scmp.eq.s32.totalorder %s19, 0
      %p39 = por %p37, %p38
      %p40 = scmp.ne.s32.totalorder %s29, %s32
      %p41 = scmp.eq.s32.totalorder %s24, 1
      %p42 = por %p40, %p41
      %p43 = scmp.ne.s32.totalorder %s32, %s33
      %p44 = scmp.eq.s32.totalorder %s24, 0
      %p45 = por %p43, %p44
      %p46 = scmp.ne.s32.totalorder %s32, %s33
      %p47 = scmp.eq.s32.totalorder %s25, 1
      %p48 = por %p46, %p47
      %p50 = scmp.ne.s32.totalorder %s33, %s49
      %p51 = scmp.eq.s32.totalorder %s25, 0
      %p52 = por %p50, %p51
      %s53 = ssub.s32 %s19, %s26
      %p54 = scmp.eq.s32.totalorder %s53, 0
      %s56 = sadd.s32 %s55, 1
      %s57 = scalar_select %p54, %s55, %s56
      %p60 = pneg %p54
      %p61 = scmp.eq.s32.totalorder %s19, 1
      %p62 = por %p60, %p61
      %p63 = scmp.ne.s32.totalorder %s55, %s58
      %p64 = scmp.eq.s32.totalorder %s19, 0
      %p65 = por %p63, %p64
      %p66 = scmp.ne.s32.totalorder %s55, %s58
      %p67 = scmp.eq.s32.totalorder %s24, 1
      %p68 = por %p66, %p67
      %p69 = scmp.ne.s32.totalorder %s58, %s59
      %p70 = scmp.eq.s32.totalorder %s24, 0
      %p71 = por %p69, %p70
      %p72 = scmp.ne.s32.totalorder %s58, %s59
      %p73 = scmp.eq.s32.totalorder %s25, 1
      %p74 = por %p72, %p73
      %p76 = scmp.ne.s32.totalorder %s59, %s75
      %p77 = scmp.eq.s32.totalorder %s25, 0
      %p78 = por %p76, %p77
      %s80 = sadd.s32 %s79, 1
      %p83 = scmp.eq.s32.totalorder %s19, 1
      %p84 = scmp.ne.s32.totalorder %s79, %s81
      %p85 = scmp.eq.s32.totalorder %s19, 0
      %p86 = por %p84, %p85
      %p87 = scmp.ne.s32.totalorder %s79, %s81
      %p88 = scmp.eq.s32.totalorder %s24, 1
      %p89 = por %p87, %p88
      %p90 = scmp.ne.s32.totalorder %s81, %s82
      %p91 = scmp.eq.s32.totalorder %s24, 0
      %p92 = por %p90, %p91
      %p93 = scmp.ne.s32.totalorder %s81, %s82
      %p94 = scmp.eq.s32.totalorder %s25, 1
      %p95 = por %p93, %p94
      %p97 = scmp.ne.s32.totalorder %s82, %s96
      %p98 = scmp.eq.s32.totalorder %s25, 0
      %p99 = por %p97, %p98
      %s101 = sadd.s32 %s100, 1
      %p104 = scmp.eq.s32.totalorder %s19, 1
      %p105 = scmp.ne.s32.totalorder %s100, %s102
      %p106 = scmp.eq.s32.totalorder %s19, 0
      %p107 = por %p105, %p106
      %p108 = scmp.ne.s32.totalorder %s100, %s102
      %p109 = scmp.eq.s32.totalorder %s24, 1
      %p110 = por %p108, %p109
      %p111 = scmp.ne.s32.totalorder %s102, %s103
      %p112 = scmp.eq.s32.totalorder %s24, 0
      %p113 = por %p111, %p112
      %p114 = scmp.ne.s32.totalorder %s102, %s103
      %p115 = scmp.eq.s32.totalorder %s25, 1
      %p116 = por %p114, %p115
      %p118 = scmp.ne.s32.totalorder %s103, %s117
      %p119 = scmp.eq.s32.totalorder %s25, 0
      %p120 = por %p118, %p119
      %s122 = sadd.s32 %s121, 1
      %p125 = scmp.eq.s32.totalorder %s19, 1
      %p126 = scmp.ne.s32.totalorder %s121, %s123
      %p127 = scmp.eq.s32.totalorder %s19, 0
      %p128 = por %p126, %p127
      %p129 = scmp.ne.s32.totalorder %s121, %s123
      %p130 = scmp.eq.s32.totalorder %s24, 1
      %p131 = por %p129, %p130
      %p132 = scmp.ne.s32.totalorder %s123, %s124
      %p133 = scmp.eq.s32.totalorder %s24, 0
      %p134 = por %p132, %p133
      %p135 = scmp.ne.s32.totalorder %s123, %s124
      %p136 = scmp.eq.s32.totalorder %s25, 1
      %p137 = por %p135, %p136
      %p139 = scmp.ne.s32.totalorder %s124, %s138
      %p140 = scmp.eq.s32.totalorder %s25, 0
      %p141 = por %p139, %p140
      %s143 = sadd.s32 %s142, 1
      %p146 = scmp.eq.s32.totalorder %s19, 1
      %p147 = scmp.ne.s32.totalorder %s142, %s144
      %p148 = scmp.eq.s32.totalorder %s19, 0
      %p149 = por %p147, %p148
      %p150 = scmp.ne.s32.totalorder %s142, %s144
      %p151 = scmp.eq.s32.totalorder %s24, 1
      %p152 = por %p150, %p151
      %p153 = scmp.ne.s32.totalorder %s144, %s145
      %p154 = scmp.eq.s32.totalorder %s24, 0
      %p155 = por %p153, %p154
      %p156 = scmp.ne.s32.totalorder %s144, %s145
      %p157 = scmp.eq.s32.totalorder %s25, 1
      %p158 = por %p156, %p157
      %p160 = scmp.ne.s32.totalorder %s145, %s159
      %p161 = scmp.eq.s32.totalorder %s25, 0
      %p162 = por %p160, %p161
      %s164 = sadd.s32 %s163, 1
      %p167 = scmp.eq.s32.totalorder %s19, 1
      %p168 = scmp.ne.s32.totalorder %s163, %s165
      %p169 = scmp.eq.s32.totalorder %s19, 0
      %p170 = por %p168, %p169
      %p171 = scmp.ne.s32.totalorder %s163, %s165
      %p172 = scmp.eq.s32.totalorder %s24, 1
      %p173 = por %p171, %p172
      %p174 = scmp.ne.s32.totalorder %s165, %s166
      %p175 = scmp.eq.s32.totalorder %s24, 0
      %p176 = por %p174, %p175
      %p177 = scmp.ne.s32.totalorder %s165, %s166
      %p178 = scmp.eq.s32.totalorder %s25, 1
      %p179 = por %p177, %p178
      %p181 = scmp.ne.s32.totalorder %s166, %s180
      %p182 = scmp.eq.s32.totalorder %s25, 0
      %p183 = por %p181, %p182
      %s185 = sadd.s32 %s184, 1
      %p188 = scmp.eq.s32.totalorder %s19, 1
      %p189 = scmp.ne.s32.totalorder %s184, %s186
      %p190 = scmp.eq.s32.totalorder %s19, 0
      %p191 = por %p189, %p190
      %p192 = scmp.ne.s32.totalorder %s184, %s186
      %p193 = scmp.eq.s32.totalorder %s24, 1
      %p194 = por %p192, %p193
      %p195 = scmp.ne.s32.totalorder %s186, %s187
      %p196 = scmp.eq.s32.totalorder %s24, 0
      %p197 = por %p195, %p196
      %p198 = scmp.ne.s32.totalorder %s186, %s187
      %p199 = scmp.eq.s32.totalorder %s25, 1
      %p200 = por %p198, %p199
      %p202 = scmp.ne.s32.totalorder %s187, %s201
      %p203 = scmp.eq.s32.totalorder %s25, 0
      %p204 = por %p202, %p203
      %s206 = sadd.s32 %s205, 1
      %p209 = scmp.eq.s32.totalorder %s19, 1
      %p210 = scmp.ne.s32.totalorder %s205, %s207
      %p211 = scmp.eq.s32.totalorder %s19, 0
      %p212 = por %p210, %p211
      %p213 = scmp.ne.s32.totalorder %s205, %s207
      %p214 = scmp.eq.s32.totalorder %s24, 1
      %p215 = por %p213, %p214
      %p216 = scmp.ne.s32.totalorder %s207, %s208
      %p217 = scmp.eq.s32.totalorder %s24, 0
      %p218 = por %p216, %p217
      %p219 = scmp.ne.s32.totalorder %s207, %s208
      %p220 = scmp.eq.s32.totalorder %s25, 1
      %p221 = por %p219, %p220
      %p223 = scmp.ne.s32.totalorder %s208, %s222
      %p224 = scmp.eq.s32.totalorder %s25, 0
      %p225 = por %p223, %p224
      %s227 = sadd.s32 %s226, 1
      %p230 = scmp.eq.s32.totalorder %s19, 1
      %p231 = scmp.ne.s32.totalorder %s226, %s228
      %p232 = scmp.eq.s32.totalorder %s19, 0
      %p233 = por %p231, %p232
      %p234 = scmp.ne.s32.totalorder %s226, %s228
      %p235 = scmp.eq.s32.totalorder %s24, 1
      %p236 = por %p234, %p235
      %p237 = scmp.ne.s32.totalorder %s228, %s229
      %p238 = scmp.eq.s32.totalorder %s24, 0
      %p239 = por %p237, %p238
      %p240 = scmp.ne.s32.totalorder %s228, %s229
      %p241 = scmp.eq.s32.totalorder %s25, 1
      %p242 = por %p240, %p241
      %p244 = scmp.ne.s32.totalorder %s229, %s243
      %p245 = scmp.eq.s32.totalorder %s25, 0
      %p246 = por %p244, %p245
      %s247 = ssub.s32 %s19, %s26
      %p248 = scmp.eq.s32.totalorder %s247, 0
      %s250 = sadd.s32 %s249, 1
      %s251 = scalar_select %p248, %s249, %s250
      %p254 = pneg %p248
      %p255 = scmp.eq.s32.totalorder %s19, 1
      %p256 = por %p254, %p255
      %p257 = scmp.ne.s32.totalorder %s249, %s252
      %p258 = scmp.eq.s32.totalorder %s19, 0
      %p259 = por %p257, %p258
      %p260 = scmp.ne.s32.totalorder %s249, %s252
      %p261 = scmp.eq.s32.totalorder %s24, 1
      %p262 = por %p260, %p261
      %p263 = scmp.ne.s32.totalorder %s252, %s253
      %p264 = scmp.eq.s32.totalorder %s24, 0
      %p265 = por %p263, %p264
      %p266 = scmp.ne.s32.totalorder %s252, %s253
      %p267 = scmp.eq.s32.totalorder %s25, 1
      %p268 = por %p266, %p267
      %p270 = scmp.ne.s32.totalorder %s253, %s269
      %p271 = scmp.eq.s32.totalorder %s25, 0
      %p272 = por %p270, %p271
      %p273 = scmp.le.s32.totalorder 1, %s19
      %p274 = scmp.lt.s32.totalorder %s19, 3
      %p275 = pnand %p273, %p274
      %p276 = pneg %p275
      // Predicated region
      $region9: #{tpu_custom_call.1} parent=5 // pred_check
        _
      $region10: #{tpu_custom_call.1} parent=5 // pred_check_branch
        %278 = sbr.rel (%p275) target = $region12
      $region11: #{tpu_custom_call.1} parent=5 // pred_region
        %s279 = ssub.s32 %s19, 1
        // Predicated region
        $region13: #{tpu_custom_call.1} parent=11 // pred_check
          %p280 = pneg %p92
        $region14: #{tpu_custom_call.1} parent=11 // pred_check_branch
          %282 = sbr.rel (%p280) target = $region16
        $region15: #{tpu_custom_call.1} parent=11 // pred_region
          _
        $region16: #{tpu_custom_call.1} parent=11 // pred_fallthru
          _
        // Predicated region
        $region17: #{tpu_custom_call.1} parent=11 // pred_check
          %p283 = pneg %p113
        $region18: #{tpu_custom_call.1} parent=11 // pred_check_branch
          %285 = sbr.rel (%p283) target = $region20
        $region19: #{tpu_custom_call.1} parent=11 // pred_region
          _
        $region20: #{tpu_custom_call.1} parent=11 // pred_fallthru
          _
        // Predicated region
        $region21: #{tpu_custom_call.1} parent=11 // pred_check
          %p286 = pneg %p134
        $region22: #{tpu_custom_call.1} parent=11 // pred_check_branch
          %288 = sbr.rel (%p286) target = $region24
        $region23: #{tpu_custom_call.1} parent=11 // pred_region
          _
        $region24: #{tpu_custom_call.1} parent=11 // pred_fallthru
          _
        // Predicated region
        $region25: #{tpu_custom_call.1} parent=11 // pred_check
          %p289 = pneg %p155
        $region26: #{tpu_custom_call.1} parent=11 // pred_check_branch
          %291 = sbr.rel (%p289) target = $region28
        $region27: #{tpu_custom_call.1} parent=11 // pred_region
          _
        $region28: #{tpu_custom_call.1} parent=11 // pred_fallthru
          _
        // Predicated region
        $region29: #{tpu_custom_call.1} parent=11 // pred_check
          %p292 = pneg %p176
        $region30: #{tpu_custom_call.1} parent=11 // pred_check_branch
          %294 = sbr.rel (%p292) target = $region32
        $region31: #{tpu_custom_call.1} parent=11 // pred_region
          _
        $region32: #{tpu_custom_call.1} parent=11 // pred_fallthru
          _
        // Predicated region
        $region33: #{tpu_custom_call.1} parent=11 // pred_check
          %p295 = pneg %p197
        $region34: #{tpu_custom_call.1} parent=11 // pred_check_branch
          %297 = sbr.rel (%p295) target = $region36
        $region35: #{tpu_custom_call.1} parent=11 // pred_region
          _
        $region36: #{tpu_custom_call.1} parent=11 // pred_fallthru
          _
        // Predicated region
        $region37: #{tpu_custom_call.1} parent=11 // pred_check
          %p298 = pneg %p218
        $region38: #{tpu_custom_call.1} parent=11 // pred_check_branch
          %300 = sbr.rel (%p298) target = $region40
        $region39: #{tpu_custom_call.1} parent=11 // pred_region
          _
        $region40: #{tpu_custom_call.1} parent=11 // pred_fallthru
          _
        // Predicated region
        $region41: #{tpu_custom_call.1} parent=11 // pred_check
          %p301 = pneg %p239
        $region42: #{tpu_custom_call.1} parent=11 // pred_check_branch
          %303 = sbr.rel (%p301) target = $region44
        $region43: #{tpu_custom_call.1} parent=11 // pred_region
          _
        $region44: #{tpu_custom_call.1} parent=11 // pred_fallthru
          _
      $region12: #{tpu_custom_call.1} parent=5 // pred_fallthru
        _
      %p304 = scmp.lt.s32.totalorder %s19, 2
      // Predicated region
      $region45: #{tpu_custom_call.1} parent=5 // pred_check
        %p305 = pneg %p304
      $region46: #{tpu_custom_call.1} parent=5 // pred_check_branch
        %307 = sbr.rel (%p305) target = $region48
      $region47: #{tpu_custom_call.1} parent=5 // pred_region
        // Predicated region
        $region49: #{tpu_custom_call.1} parent=47 // pred_check
          %p308 = pneg %p39
        $region50: #{tpu_custom_call.1} parent=47 // pred_check_branch
          %310 = sbr.rel (%p308) target = $region52
        $region51: #{tpu_custom_call.1} parent=47 // pred_region
          %s311 = smul.u32 16, %s19
          %p312 = scmp.lt.s32.totalorder %s311, 31
          %s313 = scalar_select %p312, %s311, 31
          %s314 = smul.addr %s313, 8
          %s315 = scalar_lea.vmem %s0, %s314
          %s316 = smul.u32 16, %s19
        $region52: #{tpu_custom_call.1} parent=47 // pred_fallthru
          _
        // Predicated region
        $region53: #{tpu_custom_call.1} parent=47 // pred_check
          %p317 = pneg %p65
        $region54: #{tpu_custom_call.1} parent=47 // pred_check_branch
          %319 = sbr.rel (%p317) target = $region56
        $region55: #{tpu_custom_call.1} parent=47 // pred_region
          %s320 = smul.u32 16, %s19
          %p321 = scmp.lt.s32.totalorder %s320, 31
          %s322 = scalar_select %p321, %s320, 31
          %s323 = smul.addr %s322, 8
          %s324 = scalar_lea.vmem %s1, %s323
          %s325 = smul.u32 16, %s19
        $region56: #{tpu_custom_call.1} parent=47 // pred_fallthru
          _
      $region48: #{tpu_custom_call.1} parent=5 // pred_fallthru
        _
      %p326 = scmp.le.s32.totalorder 1, %s19
      %p327 = scmp.lt.s32.totalorder %s19, 3
      %p328 = pnand %p326, %p327
      %p329 = pneg %p328
      // Predicated region
      $region57: #{tpu_custom_call.1} parent=5 // pred_check
        _
      $region58: #{tpu_custom_call.1} parent=5 // pred_check_branch
        %331 = sbr.rel (%p328) target = $region60
      $region59: #{tpu_custom_call.1} parent=5 // pred_region
        %s332 = ssub.s32 %s19, 1
        %s333 = smul.u32 16, %s24
        %p334 = scmp.lt.s32.totalorder %s333, 31
        %s335 = scalar_select %p334, %s333, 31
        %s336 = smul.addr %s335, 8
        %s337 = scalar_lea.vmem %s0, %s336
        %p338 = pneg %p45
        %p339 = pneg %p42
        %s340 = smul.u32 16, %s24
        %p341 = scmp.lt.s32.totalorder %s340, 31
        %s342 = scalar_select %p341, %s340, 31
        %s343 = smul.addr %s342, 8
        %s344 = scalar_lea.vmem %s1, %s343
        %p345 = pneg %p71
        %p346 = pneg %p68
        %p347 = pneg %p92
        %p348 = pneg %p89
        %p349 = pneg %p113
        %p350 = pneg %p110
        %p351 = pneg %p134
        %p352 = pneg %p131
        %p353 = pneg %p155
        %p354 = pneg %p152
        %p355 = pneg %p176
        %p356 = pneg %p173
        %p357 = pneg %p197
        %p358 = pneg %p194
        %p359 = pneg %p218
        %p360 = pneg %p215
        %p361 = pneg %p239
        %p362 = pneg %p236
        %p363 = pneg %p265
        %p364 = pneg %p262
        %s365 = sand.u32 %s252, 1
        %s366 = scalar_lea.sflag [#allocation3], %s365
        %s367 = sand.u32 %s252, 1
        %s368 = smul.addr %s367, 128
        %s369 = scalar_lea.vmem [#allocation2], %s368
        %s370 = smul.u32 16, %s24
        %p371 = scmp.lt.s32.totalorder %s370, 31
        %s372 = scalar_select %p371, %s370, 31
        %s373 = smul.addr %s372, 8
        %s374 = scalar_lea.vmem %s0, %s373
        %s375 = smul.u32 16, %s24
        %s376 = smul.u32 16, %s24
        %p377 = scmp.lt.s32.totalorder %s376, 31
        %s378 = scalar_select %p377, %s376, 31
        %s379 = smul.addr %s378, 8
        %s380 = scalar_lea.vmem %s1, %s379
        %s381 = smul.u32 16, %s24
        %s382 = smul.u32 16, %s24
        %v383 = vld [vmem:[%s374] sm:$0xff]
        %v384 = vld [vmem:[%s374 + $0x8] sm:$0xff]
        %v385 = vld [vmem:[%s374 + $0x10] sm:$0xff]
        %v386 = vld [vmem:[%s374 + $0x18] sm:$0xff]
        %v387 = vld [vmem:[%s374 + $0x20] sm:$0xff]
        %v388 = vld [vmem:[%s374 + $0x28] sm:$0xff]
        %v389 = vld [vmem:[%s374 + $0x30] sm:$0xff]
        %v390 = vld [vmem:[%s374 + $0x38] sm:$0xff]
        %v391 = vld [vmem:[%s374 + $0x40] sm:$0xff]
        %v392 = vld [vmem:[%s374 + $0x48] sm:$0xff]
        %v393 = vld [vmem:[%s374 + $0x50] sm:$0xff]
        %v394 = vld [vmem:[%s374 + $0x58] sm:$0xff]
        %v395 = vld [vmem:[%s374 + $0x60] sm:$0xff]
        %v396 = vld [vmem:[%s374 + $0x68] sm:$0xff]
        %v397 = vld [vmem:[%s374 + $0x70] sm:$0xff]
        %v398 = vld [vmem:[%s374 + $0x78] sm:$0xff]
        %v399 = vld [vmem:[%s2] sm:$0xff]
        %v400 = vld [vmem:[%s2 + $0x8] sm:$0xff]
        %v401 = vld [vmem:[%s3] sm:$0x1]
        %v403 = vperm.slane %v401, 0
        %vm405 = vcmask 130048
        %v407 = vsel %vm405, %v383, 0
        %v410 = vsel %vm405, %v384, 0
        %v413 = vsel %vm405, %v385, 0
        %v416 = vsel %vm405, %v386, 0
        %v419 = vsel %vm405, %v387, 0
        %v422 = vsel %vm405, %v388, 0
        %v425 = vsel %vm405, %v389, 0
        %v428 = vsel %vm405, %v390, 0
        %v431 = vsel %vm405, %v391, 0
        %v434 = vsel %vm405, %v392, 0
        %v437 = vsel %vm405, %v393, 0
        %v440 = vsel %vm405, %v394, 0
        %v443 = vsel %vm405, %v395, 0
        %v446 = vsel %vm405, %v396, 0
        %v449 = vsel %vm405, %v397, 0
        %v452 = vsel %vm405, %v398, 0
        %454 = vmatpush.msra.mxu0 0.0
        %455 = vmatpush.msra.mxu0 0.0
        %456 = vmatpush.msra.mxu0 0.0
        %457 = vmatpush.msra.mxu0 0.0
        %458 = vmatpush.msra.mxu0 0.0
        %459 = vmatpush.msra.mxu0 0.0
        %460 = vmatpush.msra.mxu0 0.0
        %461 = vmatpush.msra.mxu0 0.0
        %462 = vmatpush.msra.mxu0 0.0
        %463 = vmatpush.msra.mxu0 0.0
        %464 = vmatpush.msra.mxu0 0.0
        %465 = vmatpush.msra.mxu0 0.0
        %466 = vmatpush.msra.mxu0 0.0
        %467 = vmatpush.msra.mxu0 0.0
        %468 = vmatpush.msra.mxu0 %v400
        %469 = vmatpush.msra.mxu0 %v399
        %470 = vmatmul.f32.gmra.mxu0 %v407
        %v471 = vpop.f32.mrf.mxu0
        %v472 = vadd.f32 %v403, %v471
        %473 = vmatmul.f32.gmra.mxu0 %v410
        %v474 = vpop.f32.mrf.mxu0
        %v475 = vadd.f32 %v403, %v474
        %476 = vmatmul.f32.gmra.mxu0 %v413
        %v477 = vpop.f32.mrf.mxu0
        %v478 = vadd.f32 %v403, %v477
        %479 = vmatmul.f32.gmra.mxu0 %v416
        %v480 = vpop.f32.mrf.mxu0
        %v481 = vadd.f32 %v403, %v480
        %482 = vmatmul.f32.gmra.mxu0 %v419
        %v483 = vpop.f32.mrf.mxu0
        %v484 = vadd.f32 %v403, %v483
        %485 = vmatmul.f32.gmra.mxu0 %v422
        %v486 = vpop.f32.mrf.mxu0
        %v487 = vadd.f32 %v403, %v486
        %488 = vmatmul.f32.gmra.mxu0 %v425
        %v489 = vpop.f32.mrf.mxu0
        %v490 = vadd.f32 %v403, %v489
        %491 = vmatmul.f32.gmra.mxu0 %v428
        %v492 = vpop.f32.mrf.mxu0
        %v493 = vadd.f32 %v403, %v492
        %494 = vmatmul.f32.gmra.mxu0 %v431
        %v495 = vpop.f32.mrf.mxu0
        %v496 = vadd.f32 %v403, %v495
        %497 = vmatmul.f32.gmra.mxu0 %v434
        %v498 = vpop.f32.mrf.mxu0
        %v499 = vadd.f32 %v403, %v498
        %500 = vmatmul.f32.gmra.mxu0 %v437
        %v501 = vpop.f32.mrf.mxu0
        %v502 = vadd.f32 %v403, %v501
        %503 = vmatmul.f32.gmra.mxu0 %v440
        %v504 = vpop.f32.mrf.mxu0
        %v505 = vadd.f32 %v403, %v504
        %506 = vmatmul.f32.gmra.mxu0 %v443
        %v507 = vpop.f32.mrf.mxu0
        %v508 = vadd.f32 %v403, %v507
        %509 = vmatmul.f32.gmra.mxu0 %v446
        %v510 = vpop.f32.mrf.mxu0
        %v511 = vadd.f32 %v403, %v510
        %512 = vmatmul.f32.gmra.mxu0 %v449
        %v513 = vpop.f32.mrf.mxu0
        %v514 = vadd.f32 %v403, %v513
        %515 = vmatmul.f32.gmra.mxu0 %v452
        %v516 = vpop.f32.mrf.mxu0
        %v517 = vadd.f32 %v403, %v516
        %518 = vdwg.mxu0
        %v519 = vmax.f32 %v472, 0.0
        %v520 = vmax.f32 %v475, 0.0
        %v521 = vmax.f32 %v478, 0.0
        %v522 = vmax.f32 %v481, 0.0
        %v523 = vmax.f32 %v484, 0.0
        %v524 = vmax.f32 %v487, 0.0
        %v525 = vmax.f32 %v490, 0.0
        %v526 = vmax.f32 %v493, 0.0
        %v527 = vmax.f32 %v496, 0.0
        %v528 = vmax.f32 %v499, 0.0
        %v529 = vmax.f32 %v502, 0.0
        %v530 = vmax.f32 %v505, 0.0
        %v531 = vmax.f32 %v508, 0.0
        %v532 = vmax.f32 %v511, 0.0
        %v533 = vmax.f32 %v514, 0.0
        %v534 = vmax.f32 %v517, 0.0
        %v535 = vld [vmem:[%s4] sm:$0xff]
        %v536 = vld [vmem:[%s4 + $0x8] sm:$0xff]
        %v537 = vld [vmem:[%s4 + $0x10] sm:$0xff]
        %v538 = vld [vmem:[%s4 + $0x18] sm:$0xff]
        %v539 = vld [vmem:[%s4 + $0x20] sm:$0xff]
        %v540 = vld [vmem:[%s4 + $0x28] sm:$0xff]
        %v541 = vld [vmem:[%s4 + $0x30] sm:$0xff]
        %v542 = vld [vmem:[%s4 + $0x38] sm:$0xff]
        %v543 = vld [vmem:[%s4 + $0x40] sm:$0xff]
        %v544 = vld [vmem:[%s4 + $0x48] sm:$0xff]
        %v545 = vld [vmem:[%s4 + $0x50] sm:$0xff]
        %v546 = vld [vmem:[%s4 + $0x58] sm:$0xff]
        %v547 = vld [vmem:[%s4 + $0x60] sm:$0xff]
        %v548 = vld [vmem:[%s4 + $0x68] sm:$0xff]
        %v549 = vld [vmem:[%s4 + $0x70] sm:$0xff]
        %v550 = vld [vmem:[%s4 + $0x78] sm:$0xff]
        %v551 = vld [vmem:[%s5] sm:$0x1]
        %v553 = vperm.slane %v551, 0
        %555 = vmatpush.msra.mxu0 %v550
        %556 = vmatpush.msra.mxu0 %v549
        %557 = vmatpush.msra.mxu0 %v548
        %558 = vmatpush.msra.mxu0 %v547
        %559 = vmatpush.msra.mxu0 %v546
        %560 = vmatpush.msra.mxu0 %v545
        %561 = vmatpush.msra.mxu0 %v544
        %562 = vmatpush.msra.mxu0 %v543
        %563 = vmatpush.msra.mxu0 %v542
        %564 = vmatpush.msra.mxu0 %v541
        %565 = vmatpush.msra.mxu0 %v540
        %566 = vmatpush.msra.mxu0 %v539
        %567 = vmatpush.msra.mxu0 %v538
        %568 = vmatpush.msra.mxu0 %v537
        %569 = vmatpush.msra.mxu0 %v536
        %570 = vmatpush.msra.mxu0 %v535
        %571 = vmatmul.f32.gmra.mxu0 %v519
        %v572 = vpop.f32.mrf.mxu0
        %v573 = vadd.f32 %v553, %v572
        %574 = vmatmul.f32.gmra.mxu0 %v520
        %v575 = vpop.f32.mrf.mxu0
        %v576 = vadd.f32 %v553, %v575
        %577 = vmatmul.f32.gmra.mxu0 %v521
        %v578 = vpop.f32.mrf.mxu0
        %v579 = vadd.f32 %v553, %v578
        %580 = vmatmul.f32.gmra.mxu0 %v522
        %v581 = vpop.f32.mrf.mxu0
        %v582 = vadd.f32 %v553, %v581
        %583 = vmatmul.f32.gmra.mxu0 %v523
        %v584 = vpop.f32.mrf.mxu0
        %v585 = vadd.f32 %v553, %v584
        %586 = vmatmul.f32.gmra.mxu0 %v524
        %v587 = vpop.f32.mrf.mxu0
        %v588 = vadd.f32 %v553, %v587
        %589 = vmatmul.f32.gmra.mxu0 %v525
        %v590 = vpop.f32.mrf.mxu0
        %v591 = vadd.f32 %v553, %v590
        %592 = vmatmul.f32.gmra.mxu0 %v526
        %v593 = vpop.f32.mrf.mxu0
        %v594 = vadd.f32 %v553, %v593
        %595 = vmatmul.f32.gmra.mxu0 %v527
        %v596 = vpop.f32.mrf.mxu0
        %v597 = vadd.f32 %v553, %v596
        %598 = vmatmul.f32.gmra.mxu0 %v528
        %v599 = vpop.f32.mrf.mxu0
        %v600 = vadd.f32 %v553, %v599
        %601 = vmatmul.f32.gmra.mxu0 %v529
        %v602 = vpop.f32.mrf.mxu0
        %v603 = vadd.f32 %v553, %v602
        %604 = vmatmul.f32.gmra.mxu0 %v530
        %v605 = vpop.f32.mrf.mxu0
        %v606 = vadd.f32 %v553, %v605
        %607 = vmatmul.f32.gmra.mxu0 %v531
        %v608 = vpop.f32.mrf.mxu0
        %v609 = vadd.f32 %v553, %v608
        %610 = vmatmul.f32.gmra.mxu0 %v532
        %v611 = vpop.f32.mrf.mxu0
        %v612 = vadd.f32 %v553, %v611
        %613 = vmatmul.f32.gmra.mxu0 %v533
        %v614 = vpop.f32.mrf.mxu0
        %v615 = vadd.f32 %v553, %v614
        %616 = vmatmul.f32.gmra.mxu0 %v534
        %v617 = vpop.f32.mrf.mxu0
        %v618 = vadd.f32 %v553, %v617
        %619 = vdwg.mxu0
        %v620 = vmax.f32 %v573, 0.0
        %v621 = vmax.f32 %v576, 0.0
        %v622 = vmax.f32 %v579, 0.0
        %v623 = vmax.f32 %v582, 0.0
        %v624 = vmax.f32 %v585, 0.0
        %v625 = vmax.f32 %v588, 0.0
        %v626 = vmax.f32 %v591, 0.0
        %v627 = vmax.f32 %v594, 0.0
        %v628 = vmax.f32 %v597, 0.0
        %v629 = vmax.f32 %v600, 0.0
        %v630 = vmax.f32 %v603, 0.0
        %v631 = vmax.f32 %v606, 0.0
        %v632 = vmax.f32 %v609, 0.0
        %v633 = vmax.f32 %v612, 0.0
        %v634 = vmax.f32 %v615, 0.0
        %v635 = vmax.f32 %v618, 0.0
        %v636 = vld [vmem:[%s6] sm:$0xff]
        %v637 = vld [vmem:[%s6 + $0x8] sm:$0xff]
        %v638 = vld [vmem:[%s6 + $0x10] sm:$0xff]
        %v639 = vld [vmem:[%s6 + $0x18] sm:$0xff]
        %v640 = vld [vmem:[%s6 + $0x20] sm:$0xff]
        %v641 = vld [vmem:[%s6 + $0x28] sm:$0xff]
        %v642 = vld [vmem:[%s6 + $0x30] sm:$0xff]
        %v643 = vld [vmem:[%s6 + $0x38] sm:$0xff]
        %v644 = vld [vmem:[%s6 + $0x40] sm:$0xff]
        %v645 = vld [vmem:[%s6 + $0x48] sm:$0xff]
        %v646 = vld [vmem:[%s6 + $0x50] sm:$0xff]
        %v647 = vld [vmem:[%s6 + $0x58] sm:$0xff]
        %v648 = vld [vmem:[%s6 + $0x60] sm:$0xff]
        %v649 = vld [vmem:[%s6 + $0x68] sm:$0xff]
        %v650 = vld [vmem:[%s6 + $0x70] sm:$0xff]
        %v651 = vld [vmem:[%s6 + $0x78] sm:$0xff]
        %v652 = vld [vmem:[%s7] sm:$0x1]
        %v654 = vperm.slane %v652, 0
        %656 = vmatpush.msra.mxu0 %v651
        %657 = vmatpush.msra.mxu0 %v650
        %658 = vmatpush.msra.mxu0 %v649
        %659 = vmatpush.msra.mxu0 %v648
        %660 = vmatpush.msra.mxu0 %v647
        %661 = vmatpush.msra.mxu0 %v646
        %662 = vmatpush.msra.mxu0 %v645
        %663 = vmatpush.msra.mxu0 %v644
        %664 = vmatpush.msra.mxu0 %v643
        %665 = vmatpush.msra.mxu0 %v642
        %666 = vmatpush.msra.mxu0 %v641
        %667 = vmatpush.msra.mxu0 %v640
        %668 = vmatpush.msra.mxu0 %v639
        %669 = vmatpush.msra.mxu0 %v638
        %670 = vmatpush.msra.mxu0 %v637
        %671 = vmatpush.msra.mxu0 %v636
        %672 = vmatmul.f32.gmra.mxu0 %v620
        %v673 = vpop.f32.mrf.mxu0
        %v674 = vadd.f32 %v654, %v673
        %675 = vmatmul.f32.gmra.mxu0 %v621
        %v676 = vpop.f32.mrf.mxu0
        %v677 = vadd.f32 %v654, %v676
        %678 = vmatmul.f32.gmra.mxu0 %v622
        %v679 = vpop.f32.mrf.mxu0
        %v680 = vadd.f32 %v654, %v679
        %681 = vmatmul.f32.gmra.mxu0 %v623
        %v682 = vpop.f32.mrf.mxu0
        %v683 = vadd.f32 %v654, %v682
        %684 = vmatmul.f32.gmra.mxu0 %v624
        %v685 = vpop.f32.mrf.mxu0
        %v686 = vadd.f32 %v654, %v685
        %687 = vmatmul.f32.gmra.mxu0 %v625
        %v688 = vpop.f32.mrf.mxu0
        %v689 = vadd.f32 %v654, %v688
        %690 = vmatmul.f32.gmra.mxu0 %v626
        %v691 = vpop.f32.mrf.mxu0
        %v692 = vadd.f32 %v654, %v691
        %693 = vmatmul.f32.gmra.mxu0 %v627
        %v694 = vpop.f32.mrf.mxu0
        %v695 = vadd.f32 %v654, %v694
        %696 = vmatmul.f32.gmra.mxu0 %v628
        %v697 = vpop.f32.mrf.mxu0
        %v698 = vadd.f32 %v654, %v697
        %699 = vmatmul.f32.gmra.mxu0 %v629
        %v700 = vpop.f32.mrf.mxu0
        %v701 = vadd.f32 %v654, %v700
        %702 = vmatmul.f32.gmra.mxu0 %v630
        %v703 = vpop.f32.mrf.mxu0
        %v704 = vadd.f32 %v654, %v703
        %705 = vmatmul.f32.gmra.mxu0 %v631
        %v706 = vpop.f32.mrf.mxu0
        %v707 = vadd.f32 %v654, %v706
        %708 = vmatmul.f32.gmra.mxu0 %v632
        %v709 = vpop.f32.mrf.mxu0
        %v710 = vadd.f32 %v654, %v709
        %711 = vmatmul.f32.gmra.mxu0 %v633
        %v712 = vpop.f32.mrf.mxu0
        %v713 = vadd.f32 %v654, %v712
        %714 = vmatmul.f32.gmra.mxu0 %v634
        %v715 = vpop.f32.mrf.mxu0
        %v716 = vadd.f32 %v654, %v715
        %717 = vmatmul.f32.gmra.mxu0 %v635
        %v718 = vpop.f32.mrf.mxu0
        %v719 = vadd.f32 %v654, %v718
        %720 = vdwg.mxu0
        %v721 = vmax.f32 %v674, 0.0
        %v722 = vmax.f32 %v677, 0.0
        %v723 = vmax.f32 %v680, 0.0
        %v724 = vmax.f32 %v683, 0.0
        %v725 = vmax.f32 %v686, 0.0
        %v726 = vmax.f32 %v689, 0.0
        %v727 = vmax.f32 %v692, 0.0
        %v728 = vmax.f32 %v695, 0.0
        %v729 = vmax.f32 %v698, 0.0
        %v730 = vmax.f32 %v701, 0.0
        %v731 = vmax.f32 %v704, 0.0
        %v732 = vmax.f32 %v707, 0.0
        %v733 = vmax.f32 %v710, 0.0
        %v734 = vmax.f32 %v713, 0.0
        %v735 = vmax.f32 %v716, 0.0
        %v736 = vmax.f32 %v719, 0.0
        %v737 = vld [vmem:[%s8] sm:$0xff]
        %v738 = vld [vmem:[%s8 + $0x8] sm:$0xff]
        %v739 = vld [vmem:[%s8 + $0x10] sm:$0xff]
        %v740 = vld [vmem:[%s8 + $0x18] sm:$0xff]
        %v741 = vld [vmem:[%s8 + $0x20] sm:$0xff]
        %v742 = vld [vmem:[%s8 + $0x28] sm:$0xff]
        %v743 = vld [vmem:[%s8 + $0x30] sm:$0xff]
        %v744 = vld [vmem:[%s8 + $0x38] sm:$0xff]
        %v745 = vld [vmem:[%s8 + $0x40] sm:$0xff]
        %v746 = vld [vmem:[%s8 + $0x48] sm:$0xff]
        %v747 = vld [vmem:[%s8 + $0x50] sm:$0xff]
        %v748 = vld [vmem:[%s8 + $0x58] sm:$0xff]
        %v749 = vld [vmem:[%s8 + $0x60] sm:$0xff]
        %v750 = vld [vmem:[%s8 + $0x68] sm:$0xff]
        %v751 = vld [vmem:[%s8 + $0x70] sm:$0xff]
        %v752 = vld [vmem:[%s8 + $0x78] sm:$0xff]
        %v753 = vld [vmem:[%s9] sm:$0x1]
        %v755 = vperm.slane %v753, 0
        %757 = vmatpush.msra.mxu0 %v752
        %758 = vmatpush.msra.mxu0 %v751
        %759 = vmatpush.msra.mxu0 %v750
        %760 = vmatpush.msra.mxu0 %v749
        %761 = vmatpush.msra.mxu0 %v748
        %762 = vmatpush.msra.mxu0 %v747
        %763 = vmatpush.msra.mxu0 %v746
        %764 = vmatpush.msra.mxu0 %v745
        %765 = vmatpush.msra.mxu0 %v744
        %766 = vmatpush.msra.mxu0 %v743
        %767 = vmatpush.msra.mxu0 %v742
        %768 = vmatpush.msra.mxu0 %v741
        %769 = vmatpush.msra.mxu0 %v740
        %770 = vmatpush.msra.mxu0 %v739
        %771 = vmatpush.msra.mxu0 %v738
        %772 = vmatpush.msra.mxu0 %v737
        %773 = vmatmul.f32.gmra.mxu0 %v721
        %v774 = vpop.f32.mrf.mxu0
        %v775 = vadd.f32 %v755, %v774
        %776 = vmatmul.f32.gmra.mxu0 %v722
        %v777 = vpop.f32.mrf.mxu0
        %v778 = vadd.f32 %v755, %v777
        %779 = vmatmul.f32.gmra.mxu0 %v723
        %v780 = vpop.f32.mrf.mxu0
        %v781 = vadd.f32 %v755, %v780
        %782 = vmatmul.f32.gmra.mxu0 %v724
        %v783 = vpop.f32.mrf.mxu0
        %v784 = vadd.f32 %v755, %v783
        %785 = vmatmul.f32.gmra.mxu0 %v725
        %v786 = vpop.f32.mrf.mxu0
        %v787 = vadd.f32 %v755, %v786
        %788 = vmatmul.f32.gmra.mxu0 %v726
        %v789 = vpop.f32.mrf.mxu0
        %v790 = vadd.f32 %v755, %v789
        %791 = vmatmul.f32.gmra.mxu0 %v727
        %v792 = vpop.f32.mrf.mxu0
        %v793 = vadd.f32 %v755, %v792
        %794 = vmatmul.f32.gmra.mxu0 %v728
        %v795 = vpop.f32.mrf.mxu0
        %v796 = vadd.f32 %v755, %v795
        %797 = vmatmul.f32.gmra.mxu0 %v729
        %v798 = vpop.f32.mrf.mxu0
        %v799 = vadd.f32 %v755, %v798
        %800 = vmatmul.f32.gmra.mxu0 %v730
        %v801 = vpop.f32.mrf.mxu0
        %v802 = vadd.f32 %v755, %v801
        %803 = vmatmul.f32.gmra.mxu0 %v731
        %v804 = vpop.f32.mrf.mxu0
        %v805 = vadd.f32 %v755, %v804
        %806 = vmatmul.f32.gmra.mxu0 %v732
        %v807 = vpop.f32.mrf.mxu0
        %v808 = vadd.f32 %v755, %v807
        %809 = vmatmul.f32.gmra.mxu0 %v733
        %v810 = vpop.f32.mrf.mxu0
        %v811 = vadd.f32 %v755, %v810
        %812 = vmatmul.f32.gmra.mxu0 %v734
        %v813 = vpop.f32.mrf.mxu0
        %v814 = vadd.f32 %v755, %v813
        %815 = vmatmul.f32.gmra.mxu0 %v735
        %v816 = vpop.f32.mrf.mxu0
        %v817 = vadd.f32 %v755, %v816
        %818 = vmatmul.f32.gmra.mxu0 %v736
        %v819 = vpop.f32.mrf.mxu0
        %v820 = vadd.f32 %v755, %v819
        %821 = vdwg.mxu0
        %v822 = vmax.f32 %v775, -20.0
        %v823 = vmax.f32 %v778, -20.0
        %v824 = vmax.f32 %v781, -20.0
        %v825 = vmax.f32 %v784, -20.0
        %v826 = vmax.f32 %v787, -20.0
        %v827 = vmax.f32 %v790, -20.0
        %v828 = vmax.f32 %v793, -20.0
        %v829 = vmax.f32 %v796, -20.0
        %v830 = vmax.f32 %v799, -20.0
        %v831 = vmax.f32 %v802, -20.0
        %v832 = vmax.f32 %v805, -20.0
        %v833 = vmax.f32 %v808, -20.0
        %v834 = vmax.f32 %v811, -20.0
        %v835 = vmax.f32 %v814, -20.0
        %v836 = vmax.f32 %v817, -20.0
        %v837 = vmax.f32 %v820, -20.0
        %v838 = vmin.f32 %v822, 2.0
        %v839 = vmin.f32 %v823, 2.0
        %v840 = vmin.f32 %v824, 2.0
        %v841 = vmin.f32 %v825, 2.0
        %v842 = vmin.f32 %v826, 2.0
        %v843 = vmin.f32 %v827, 2.0
        %v844 = vmin.f32 %v828, 2.0
        %v845 = vmin.f32 %v829, 2.0
        %v846 = vmin.f32 %v830, 2.0
        %v847 = vmin.f32 %v831, 2.0
        %v848 = vmin.f32 %v832, 2.0
        %v849 = vmin.f32 %v833, 2.0
        %v850 = vmin.f32 %v834, 2.0
        %v851 = vmin.f32 %v835, 2.0
        %v852 = vmin.f32 %v836, 2.0
        %v853 = vmin.f32 %v837, 2.0
        %v854 = vmul.f32 %v838, 1.442695
        %v855 = vpow.pop %v854
        %v856 = vmul.f32 %v839, 1.442695
        %v857 = vpow.pop %v856
        %v858 = vmul.f32 %v840, 1.442695
        %v859 = vpow.pop %v858
        %v860 = vmul.f32 %v841, 1.442695
        %v861 = vpow.pop %v860
        %v862 = vmul.f32 %v842, 1.442695
        %v863 = vpow.pop %v862
        %v864 = vmul.f32 %v843, 1.442695
        %v865 = vpow.pop %v864
        %v866 = vmul.f32 %v844, 1.442695
        %v867 = vpow.pop %v866
        %v868 = vmul.f32 %v845, 1.442695
        %v869 = vpow.pop %v868
        %v870 = vmul.f32 %v846, 1.442695
        %v871 = vpow.pop %v870
        %v872 = vmul.f32 %v847, 1.442695
        %v873 = vpow.pop %v872
        %v874 = vmul.f32 %v848, 1.442695
        %v875 = vpow.pop %v874
        %v876 = vmul.f32 %v849, 1.442695
        %v877 = vpow.pop %v876
        %v878 = vmul.f32 %v850, 1.442695
        %v879 = vpow.pop %v878
        %v880 = vmul.f32 %v851, 1.442695
        %v881 = vpow.pop %v880
        %v882 = vmul.f32 %v852, 1.442695
        %v883 = vpow.pop %v882
        %v884 = vmul.f32 %v853, 1.442695
        %v885 = vpow.pop %v884
        %v886 = vld [vmem:[%s380] sm:$0xff]
        %v887 = vld [vmem:[%s380 + $0x8] sm:$0xff]
        %v888 = vld [vmem:[%s380 + $0x10] sm:$0xff]
        %v889 = vld [vmem:[%s380 + $0x18] sm:$0xff]
        %v890 = vld [vmem:[%s380 + $0x20] sm:$0xff]
        %v891 = vld [vmem:[%s380 + $0x28] sm:$0xff]
        %v892 = vld [vmem:[%s380 + $0x30] sm:$0xff]
        %v893 = vld [vmem:[%s380 + $0x38] sm:$0xff]
        %v894 = vld [vmem:[%s380 + $0x40] sm:$0xff]
        %v895 = vld [vmem:[%s380 + $0x48] sm:$0xff]
        %v896 = vld [vmem:[%s380 + $0x50] sm:$0xff]
        %v897 = vld [vmem:[%s380 + $0x58] sm:$0xff]
        %v898 = vld [vmem:[%s380 + $0x60] sm:$0xff]
        %v899 = vld [vmem:[%s380 + $0x68] sm:$0xff]
        %v900 = vld [vmem:[%s380 + $0x70] sm:$0xff]
        %v901 = vld [vmem:[%s380 + $0x78] sm:$0xff]
        %918 = vrot.lane.b32.xlu0 %v886, 8
        %v919 = vpop.permute.xlu0 %918
        %920 = vrot.lane.b32.xlu0 %v887, 8
        %v921 = vpop.permute.xlu0 %920
        %922 = vrot.lane.b32.xlu0 %v888, 8
        %v923 = vpop.permute.xlu0 %922
        %924 = vrot.lane.b32.xlu0 %v889, 8
        %v925 = vpop.permute.xlu0 %924
        %926 = vrot.lane.b32.xlu0 %v890, 8
        %v927 = vpop.permute.xlu0 %926
        %928 = vrot.lane.b32.xlu0 %v891, 8
        %v929 = vpop.permute.xlu0 %928
        %930 = vrot.lane.b32.xlu0 %v892, 8
        %v931 = vpop.permute.xlu0 %930
        %932 = vrot.lane.b32.xlu0 %v893, 8
        %v933 = vpop.permute.xlu0 %932
        %934 = vrot.lane.b32.xlu0 %v894, 8
        %v935 = vpop.permute.xlu0 %934
        %936 = vrot.lane.b32.xlu0 %v895, 8
        %v937 = vpop.permute.xlu0 %936
        %938 = vrot.lane.b32.xlu0 %v896, 8
        %v939 = vpop.permute.xlu0 %938
        %940 = vrot.lane.b32.xlu0 %v897, 8
        %v941 = vpop.permute.xlu0 %940
        %942 = vrot.lane.b32.xlu0 %v898, 8
        %v943 = vpop.permute.xlu0 %942
        %944 = vrot.lane.b32.xlu0 %v899, 8
        %v945 = vpop.permute.xlu0 %944
        %946 = vrot.lane.b32.xlu0 %v900, 8
        %v947 = vpop.permute.xlu0 %946
        %948 = vrot.lane.b32.xlu0 %v901, 8
        %v949 = vpop.permute.xlu0 %948
        %v966 = vmul.f32 %v855, %v919
        %v967 = vmul.f32 %v857, %v921
        %v968 = vmul.f32 %v859, %v923
        %v969 = vmul.f32 %v861, %v925
        %v970 = vmul.f32 %v863, %v927
        %v971 = vmul.f32 %v865, %v929
        %v972 = vmul.f32 %v867, %v931
        %v973 = vmul.f32 %v869, %v933
        %v974 = vmul.f32 %v871, %v935
        %v975 = vmul.f32 %v873, %v937
        %v976 = vmul.f32 %v875, %v939
        %v977 = vmul.f32 %v877, %v941
        %v978 = vmul.f32 %v879, %v943
        %v979 = vmul.f32 %v881, %v945
        %v980 = vmul.f32 %v883, %v947
        %v981 = vmul.f32 %v885, %v949
        %998 = vrot.lane.b32.xlu0 %v966, 120
        %v999 = vpop.permute.xlu0 %998
        %1000 = vrot.lane.b32.xlu0 %v967, 120
        %v1001 = vpop.permute.xlu0 %1000
        %1002 = vrot.lane.b32.xlu0 %v968, 120
        %v1003 = vpop.permute.xlu0 %1002
        %1004 = vrot.lane.b32.xlu0 %v969, 120
        %v1005 = vpop.permute.xlu0 %1004
        %1006 = vrot.lane.b32.xlu0 %v970, 120
        %v1007 = vpop.permute.xlu0 %1006
        %1008 = vrot.lane.b32.xlu0 %v971, 120
        %v1009 = vpop.permute.xlu0 %1008
        %1010 = vrot.lane.b32.xlu0 %v972, 120
        %v1011 = vpop.permute.xlu0 %1010
        %1012 = vrot.lane.b32.xlu0 %v973, 120
        %v1013 = vpop.permute.xlu0 %1012
        %1014 = vrot.lane.b32.xlu0 %v974, 120
        %v1015 = vpop.permute.xlu0 %1014
        %1016 = vrot.lane.b32.xlu0 %v975, 120
        %v1017 = vpop.permute.xlu0 %1016
        %1018 = vrot.lane.b32.xlu0 %v976, 120
        %v1019 = vpop.permute.xlu0 %1018
        %1020 = vrot.lane.b32.xlu0 %v977, 120
        %v1021 = vpop.permute.xlu0 %1020
        %1022 = vrot.lane.b32.xlu0 %v978, 120
        %v1023 = vpop.permute.xlu0 %1022
        %1024 = vrot.lane.b32.xlu0 %v979, 120
        %v1025 = vpop.permute.xlu0 %1024
        %1026 = vrot.lane.b32.xlu0 %v980, 120
        %v1027 = vpop.permute.xlu0 %1026
        %1028 = vrot.lane.b32.xlu0 %v981, 120
        %v1029 = vpop.permute.xlu0 %1028
        %v1046 = vadd.f32 %v775, %v999
        %v1047 = vadd.f32 %v778, %v1001
        %v1048 = vadd.f32 %v781, %v1003
        %v1049 = vadd.f32 %v784, %v1005
        %v1050 = vadd.f32 %v787, %v1007
        %v1051 = vadd.f32 %v790, %v1009
        %v1052 = vadd.f32 %v793, %v1011
        %v1053 = vadd.f32 %v796, %v1013
        %v1054 = vadd.f32 %v799, %v1015
        %v1055 = vadd.f32 %v802, %v1017
        %v1056 = vadd.f32 %v805, %v1019
        %v1057 = vadd.f32 %v808, %v1021
        %v1058 = vadd.f32 %v811, %v1023
        %v1059 = vadd.f32 %v814, %v1025
        %v1060 = vadd.f32 %v817, %v1027
        %v1061 = vadd.f32 %v820, %v1029
        %v1062 = vtanh.pop %v1046
        %v1063 = vtanh.pop %v1047
        %v1064 = vtanh.pop %v1048
        %v1065 = vtanh.pop %v1049
        %v1066 = vtanh.pop %v1050
        %v1067 = vtanh.pop %v1051
        %v1068 = vtanh.pop %v1052
        %v1069 = vtanh.pop %v1053
        %v1070 = vtanh.pop %v1054
        %v1071 = vtanh.pop %v1055
        %v1072 = vtanh.pop %v1056
        %v1073 = vtanh.pop %v1057
        %v1074 = vtanh.pop %v1058
        %v1075 = vtanh.pop %v1059
        %v1076 = vtanh.pop %v1060
        %v1077 = vtanh.pop %v1061
        %v1078 = vmul.f32 %v886, -0.5
        %v1079 = vmul.f32 %v887, -0.5
        %v1080 = vmul.f32 %v888, -0.5
        %v1081 = vmul.f32 %v889, -0.5
        %v1082 = vmul.f32 %v890, -0.5
        %v1083 = vmul.f32 %v891, -0.5
        %v1084 = vmul.f32 %v892, -0.5
        %v1085 = vmul.f32 %v893, -0.5
        %v1086 = vmul.f32 %v894, -0.5
        %v1087 = vmul.f32 %v895, -0.5
        %v1088 = vmul.f32 %v896, -0.5
        %v1089 = vmul.f32 %v897, -0.5
        %v1090 = vmul.f32 %v898, -0.5
        %v1091 = vmul.f32 %v899, -0.5
        %v1092 = vmul.f32 %v900, -0.5
        %v1093 = vmul.f32 %v901, -0.5
        %v1094 = vmul.f32 %v1078, %v886
        %v1095 = vmul.f32 %v1079, %v887
        %v1096 = vmul.f32 %v1080, %v888
        %v1097 = vmul.f32 %v1081, %v889
        %v1098 = vmul.f32 %v1082, %v890
        %v1099 = vmul.f32 %v1083, %v891
        %v1100 = vmul.f32 %v1084, %v892
        %v1101 = vmul.f32 %v1085, %v893
        %v1102 = vmul.f32 %v1086, %v894
        %v1103 = vmul.f32 %v1087, %v895
        %v1104 = vmul.f32 %v1088, %v896
        %v1105 = vmul.f32 %v1089, %v897
        %v1106 = vmul.f32 %v1090, %v898
        %v1107 = vmul.f32 %v1091, %v899
        %v1108 = vmul.f32 %v1092, %v900
        %v1109 = vmul.f32 %v1093, %v901
        %1126 = vrot.lane.b32.xlu0 %v838, 120
        %v1127 = vpop.permute.xlu0 %1126
        %1128 = vrot.lane.b32.xlu0 %v839, 120
        %v1129 = vpop.permute.xlu0 %1128
        %1130 = vrot.lane.b32.xlu0 %v840, 120
        %v1131 = vpop.permute.xlu0 %1130
        %1132 = vrot.lane.b32.xlu0 %v841, 120
        %v1133 = vpop.permute.xlu0 %1132
        %1134 = vrot.lane.b32.xlu0 %v842, 120
        %v1135 = vpop.permute.xlu0 %1134
        %1136 = vrot.lane.b32.xlu0 %v843, 120
        %v1137 = vpop.permute.xlu0 %1136
        %1138 = vrot.lane.b32.xlu0 %v844, 120
        %v1139 = vpop.permute.xlu0 %1138
        %1140 = vrot.lane.b32.xlu0 %v845, 120
        %v1141 = vpop.permute.xlu0 %1140
        %1142 = vrot.lane.b32.xlu0 %v846, 120
        %v1143 = vpop.permute.xlu0 %1142
        %1144 = vrot.lane.b32.xlu0 %v847, 120
        %v1145 = vpop.permute.xlu0 %1144
        %1146 = vrot.lane.b32.xlu0 %v848, 120
        %v1147 = vpop.permute.xlu0 %1146
        %1148 = vrot.lane.b32.xlu0 %v849, 120
        %v1149 = vpop.permute.xlu0 %1148
        %1150 = vrot.lane.b32.xlu0 %v850, 120
        %v1151 = vpop.permute.xlu0 %1150
        %1152 = vrot.lane.b32.xlu0 %v851, 120
        %v1153 = vpop.permute.xlu0 %1152
        %1154 = vrot.lane.b32.xlu0 %v852, 120
        %v1155 = vpop.permute.xlu0 %1154
        %1156 = vrot.lane.b32.xlu0 %v853, 120
        %v1157 = vpop.permute.xlu0 %1156
        %v1174 = vsub.f32 %v1094, %v1127
        %v1175 = vsub.f32 %v1095, %v1129
        %v1176 = vsub.f32 %v1096, %v1131
        %v1177 = vsub.f32 %v1097, %v1133
        %v1178 = vsub.f32 %v1098, %v1135
        %v1179 = vsub.f32 %v1099, %v1137
        %v1180 = vsub.f32 %v1100, %v1139
        %v1181 = vsub.f32 %v1101, %v1141
        %v1182 = vsub.f32 %v1102, %v1143
        %v1183 = vsub.f32 %v1103, %v1145
        %v1184 = vsub.f32 %v1104, %v1147
        %v1185 = vsub.f32 %v1105, %v1149
        %v1186 = vsub.f32 %v1106, %v1151
        %v1187 = vsub.f32 %v1107, %v1153
        %v1188 = vsub.f32 %v1108, %v1155
        %v1189 = vsub.f32 %v1109, %v1157
        %v1190 = vsub.f32 %v1174, 0.9189385
        %v1191 = vsub.f32 %v1175, 0.9189385
        %v1192 = vsub.f32 %v1176, 0.9189385
        %v1193 = vsub.f32 %v1177, 0.9189385
        %v1194 = vsub.f32 %v1178, 0.9189385
        %v1195 = vsub.f32 %v1179, 0.9189385
        %v1196 = vsub.f32 %v1180, 0.9189385
        %v1197 = vsub.f32 %v1181, 0.9189385
        %v1198 = vsub.f32 %v1182, 0.9189385
        %v1199 = vsub.f32 %v1183, 0.9189385
        %v1200 = vsub.f32 %v1184, 0.9189385
        %v1201 = vsub.f32 %v1185, 0.9189385
        %v1202 = vsub.f32 %v1186, 0.9189385
        %v1203 = vsub.f32 %v1187, 0.9189385
        %v1204 = vsub.f32 %v1188, 0.9189385
        %v1205 = vsub.f32 %v1189, 0.9189385
        %v1206 = vmul.f32 %v1046, 2.0
        %v1207 = vmul.f32 %v1047, 2.0
        %v1208 = vmul.f32 %v1048, 2.0
        %v1209 = vmul.f32 %v1049, 2.0
        %v1210 = vmul.f32 %v1050, 2.0
        %v1211 = vmul.f32 %v1051, 2.0
        %v1212 = vmul.f32 %v1052, 2.0
        %v1213 = vmul.f32 %v1053, 2.0
        %v1214 = vmul.f32 %v1054, 2.0
        %v1215 = vmul.f32 %v1055, 2.0
        %v1216 = vmul.f32 %v1056, 2.0
        %v1217 = vmul.f32 %v1057, 2.0
        %v1218 = vmul.f32 %v1058, 2.0
        %v1219 = vmul.f32 %v1059, 2.0
        %v1220 = vmul.f32 %v1060, 2.0
        %v1221 = vmul.f32 %v1061, 2.0
        %v1222 = vsub.f32 0.0, %v1206
        %v1223 = vsub.f32 0.0, %v1207
        %v1224 = vsub.f32 0.0, %v1208
        %v1225 = vsub.f32 0.0, %v1209
        %v1226 = vsub.f32 0.0, %v1210
        %v1227 = vsub.f32 0.0, %v1211
        %v1228 = vsub.f32 0.0, %v1212
        %v1229 = vsub.f32 0.0, %v1213
        %v1230 = vsub.f32 0.0, %v1214
        %v1231 = vsub.f32 0.0, %v1215
        %v1232 = vsub.f32 0.0, %v1216
        %v1233 = vsub.f32 0.0, %v1217
        %v1234 = vsub.f32 0.0, %v1218
        %v1235 = vsub.f32 0.0, %v1219
        %v1236 = vsub.f32 0.0, %v1220
        %v1237 = vsub.f32 0.0, %v1221
        %v1238 = vmax.f32 %v1222, 0.0
        %v1239 = vmax.f32 %v1223, 0.0
        %v1240 = vmax.f32 %v1224, 0.0
        %v1241 = vmax.f32 %v1225, 0.0
        %v1242 = vmax.f32 %v1226, 0.0
        %v1243 = vmax.f32 %v1227, 0.0
        %v1244 = vmax.f32 %v1228, 0.0
        %v1245 = vmax.f32 %v1229, 0.0
        %v1246 = vmax.f32 %v1230, 0.0
        %v1247 = vmax.f32 %v1231, 0.0
        %v1248 = vmax.f32 %v1232, 0.0
        %v1249 = vmax.f32 %v1233, 0.0
        %v1250 = vmax.f32 %v1234, 0.0
        %v1251 = vmax.f32 %v1235, 0.0
        %v1252 = vmax.f32 %v1236, 0.0
        %v1253 = vmax.f32 %v1237, 0.0
        %v1254 = vand.u32 2147483647, %v1206
        %v1255 = vand.u32 2147483647, %v1207
        %v1256 = vand.u32 2147483647, %v1208
        %v1257 = vand.u32 2147483647, %v1209
        %v1258 = vand.u32 2147483647, %v1210
        %v1259 = vand.u32 2147483647, %v1211
        %v1260 = vand.u32 2147483647, %v1212
        %v1261 = vand.u32 2147483647, %v1213
        %v1262 = vand.u32 2147483647, %v1214
        %v1263 = vand.u32 2147483647, %v1215
        %v1264 = vand.u32 2147483647, %v1216
        %v1265 = vand.u32 2147483647, %v1217
        %v1266 = vand.u32 2147483647, %v1218
        %v1267 = vand.u32 2147483647, %v1219
        %v1268 = vand.u32 2147483647, %v1220
        %v1269 = vand.u32 2147483647, %v1221
        %v1270 = vsub.f32 0.0, %v1254
        %v1271 = vsub.f32 0.0, %v1255
        %v1272 = vsub.f32 0.0, %v1256
        %v1273 = vsub.f32 0.0, %v1257
        %v1274 = vsub.f32 0.0, %v1258
        %v1275 = vsub.f32 0.0, %v1259
        %v1276 = vsub.f32 0.0, %v1260
        %v1277 = vsub.f32 0.0, %v1261
        %v1278 = vsub.f32 0.0, %v1262
        %v1279 = vsub.f32 0.0, %v1263
        %v1280 = vsub.f32 0.0, %v1264
        %v1281 = vsub.f32 0.0, %v1265
        %v1282 = vsub.f32 0.0, %v1266
        %v1283 = vsub.f32 0.0, %v1267
        %v1284 = vsub.f32 0.0, %v1268
        %v1285 = vsub.f32 0.0, %v1269
        %v1286 = vmul.f32 %v1270, 1.442695
        %v1287 = vpow.pop %v1286
        %v1288 = vmul.f32 %v1271, 1.442695
        %v1289 = vpow.pop %v1288
        %v1290 = vmul.f32 %v1272, 1.442695
        %v1291 = vpow.pop %v1290
        %v1292 = vmul.f32 %v1273, 1.442695
        %v1293 = vpow.pop %v1292
        %v1294 = vmul.f32 %v1274, 1.442695
        %v1295 = vpow.pop %v1294
        %v1296 = vmul.f32 %v1275, 1.442695
        %v1297 = vpow.pop %v1296
        %v1298 = vmul.f32 %v1276, 1.442695
        %v1299 = vpow.pop %v1298
        %v1300 = vmul.f32 %v1277, 1.442695
        %v1301 = vpow.pop %v1300
        %v1302 = vmul.f32 %v1278, 1.442695
        %v1303 = vpow.pop %v1302
        %v1304 = vmul.f32 %v1279, 1.442695
        %v1305 = vpow.pop %v1304
        %v1306 = vmul.f32 %v1280, 1.442695
        %v1307 = vpow.pop %v1306
        %v1308 = vmul.f32 %v1281, 1.442695
        %v1309 = vpow.pop %v1308
        %v1310 = vmul.f32 %v1282, 1.442695
        %v1311 = vpow.pop %v1310
        %v1312 = vmul.f32 %v1283, 1.442695
        %v1313 = vpow.pop %v1312
        %v1314 = vmul.f32 %v1284, 1.442695
        %v1315 = vpow.pop %v1314
        %v1316 = vmul.f32 %v1285, 1.442695
        %v1317 = vpow.pop %v1316
        %v1318 = vadd.f32 %v1287, 1.0
        %v1319 = vlog2.pop %v1318
        %v1320 = vmul.f32 %v1319, 0.6931472
        %v1321 = vmul.f32 -0.5, %v1287
        %v1322 = vadd.f32 %v1321, 1.0
        %v1323 = vmul.f32 %v1322, %v1287
        %v1324 = vand.u32 2147483647, %v1287
        %vm1325 = vcmp.lt.f32.partialorder %v1324, 0.0004427343
        %v1326 = vsel %vm1325, %v1323, %v1320
        %v1327 = vadd.f32 %v1289, 1.0
        %v1328 = vlog2.pop %v1327
        %v1329 = vmul.f32 %v1328, 0.6931472
        %v1330 = vmul.f32 -0.5, %v1289
        %v1331 = vadd.f32 %v1330, 1.0
        %v1332 = vmul.f32 %v1331, %v1289
        %v1333 = vand.u32 2147483647, %v1289
        %vm1334 = vcmp.lt.f32.partialorder %v1333, 0.0004427343
        %v1335 = vsel %vm1334, %v1332, %v1329
        %v1336 = vadd.f32 %v1291, 1.0
        %v1337 = vlog2.pop %v1336
        %v1338 = vmul.f32 %v1337, 0.6931472
        %v1339 = vmul.f32 -0.5, %v1291
        %v1340 = vadd.f32 %v1339, 1.0
        %v1341 = vmul.f32 %v1340, %v1291
        %v1342 = vand.u32 2147483647, %v1291
        %vm1343 = vcmp.lt.f32.partialorder %v1342, 0.0004427343
        %v1344 = vsel %vm1343, %v1341, %v1338
        %v1345 = vadd.f32 %v1293, 1.0
        %v1346 = vlog2.pop %v1345
        %v1347 = vmul.f32 %v1346, 0.6931472
        %v1348 = vmul.f32 -0.5, %v1293
        %v1349 = vadd.f32 %v1348, 1.0
        %v1350 = vmul.f32 %v1349, %v1293
        %v1351 = vand.u32 2147483647, %v1293
        %vm1352 = vcmp.lt.f32.partialorder %v1351, 0.0004427343
        %v1353 = vsel %vm1352, %v1350, %v1347
        %v1354 = vadd.f32 %v1295, 1.0
        %v1355 = vlog2.pop %v1354
        %v1356 = vmul.f32 %v1355, 0.6931472
        %v1357 = vmul.f32 -0.5, %v1295
        %v1358 = vadd.f32 %v1357, 1.0
        %v1359 = vmul.f32 %v1358, %v1295
        %v1360 = vand.u32 2147483647, %v1295
        %vm1361 = vcmp.lt.f32.partialorder %v1360, 0.0004427343
        %v1362 = vsel %vm1361, %v1359, %v1356
        %v1363 = vadd.f32 %v1297, 1.0
        %v1364 = vlog2.pop %v1363
        %v1365 = vmul.f32 %v1364, 0.6931472
        %v1366 = vmul.f32 -0.5, %v1297
        %v1367 = vadd.f32 %v1366, 1.0
        %v1368 = vmul.f32 %v1367, %v1297
        %v1369 = vand.u32 2147483647, %v1297
        %vm1370 = vcmp.lt.f32.partialorder %v1369, 0.0004427343
        %v1371 = vsel %vm1370, %v1368, %v1365
        %v1372 = vadd.f32 %v1299, 1.0
        %v1373 = vlog2.pop %v1372
        %v1374 = vmul.f32 %v1373, 0.6931472
        %v1375 = vmul.f32 -0.5, %v1299
        %v1376 = vadd.f32 %v1375, 1.0
        %v1377 = vmul.f32 %v1376, %v1299
        %v1378 = vand.u32 2147483647, %v1299
        %vm1379 = vcmp.lt.f32.partialorder %v1378, 0.0004427343
        %v1380 = vsel %vm1379, %v1377, %v1374
        %v1381 = vadd.f32 %v1301, 1.0
        %v1382 = vlog2.pop %v1381
        %v1383 = vmul.f32 %v1382, 0.6931472
        %v1384 = vmul.f32 -0.5, %v1301
        %v1385 = vadd.f32 %v1384, 1.0
        %v1386 = vmul.f32 %v1385, %v1301
        %v1387 = vand.u32 2147483647, %v1301
        %vm1388 = vcmp.lt.f32.partialorder %v1387, 0.0004427343
        %v1389 = vsel %vm1388, %v1386, %v1383
        %v1390 = vadd.f32 %v1303, 1.0
        %v1391 = vlog2.pop %v1390
        %v1392 = vmul.f32 %v1391, 0.6931472
        %v1393 = vmul.f32 -0.5, %v1303
        %v1394 = vadd.f32 %v1393, 1.0
        %v1395 = vmul.f32 %v1394, %v1303
        %v1396 = vand.u32 2147483647, %v1303
        %vm1397 = vcmp.lt.f32.partialorder %v1396, 0.0004427343
        %v1398 = vsel %vm1397, %v1395, %v1392
        %v1399 = vadd.f32 %v1305, 1.0
        %v1400 = vlog2.pop %v1399
        %v1401 = vmul.f32 %v1400, 0.6931472
        %v1402 = vmul.f32 -0.5, %v1305
        %v1403 = vadd.f32 %v1402, 1.0
        %v1404 = vmul.f32 %v1403, %v1305
        %v1405 = vand.u32 2147483647, %v1305
        %vm1406 = vcmp.lt.f32.partialorder %v1405, 0.0004427343
        %v1407 = vsel %vm1406, %v1404, %v1401
        %v1408 = vadd.f32 %v1307, 1.0
        %v1409 = vlog2.pop %v1408
        %v1410 = vmul.f32 %v1409, 0.6931472
        %v1411 = vmul.f32 -0.5, %v1307
        %v1412 = vadd.f32 %v1411, 1.0
        %v1413 = vmul.f32 %v1412, %v1307
        %v1414 = vand.u32 2147483647, %v1307
        %vm1415 = vcmp.lt.f32.partialorder %v1414, 0.0004427343
        %v1416 = vsel %vm1415, %v1413, %v1410
        %v1417 = vadd.f32 %v1309, 1.0
        %v1418 = vlog2.pop %v1417
        %v1419 = vmul.f32 %v1418, 0.6931472
        %v1420 = vmul.f32 -0.5, %v1309
        %v1421 = vadd.f32 %v1420, 1.0
        %v1422 = vmul.f32 %v1421, %v1309
        %v1423 = vand.u32 2147483647, %v1309
        %vm1424 = vcmp.lt.f32.partialorder %v1423, 0.0004427343
        %v1425 = vsel %vm1424, %v1422, %v1419
        %v1426 = vadd.f32 %v1311, 1.0
        %v1427 = vlog2.pop %v1426
        %v1428 = vmul.f32 %v1427, 0.6931472
        %v1429 = vmul.f32 -0.5, %v1311
        %v1430 = vadd.f32 %v1429, 1.0
        %v1431 = vmul.f32 %v1430, %v1311
        %v1432 = vand.u32 2147483647, %v1311
        %vm1433 = vcmp.lt.f32.partialorder %v1432, 0.0004427343
        %v1434 = vsel %vm1433, %v1431, %v1428
        %v1435 = vadd.f32 %v1313, 1.0
        %v1436 = vlog2.pop %v1435
        %v1437 = vmul.f32 %v1436, 0.6931472
        %v1438 = vmul.f32 -0.5, %v1313
        %v1439 = vadd.f32 %v1438, 1.0
        %v1440 = vmul.f32 %v1439, %v1313
        %v1441 = vand.u32 2147483647, %v1313
        %vm1442 = vcmp.lt.f32.partialorder %v1441, 0.0004427343
        %v1443 = vsel %vm1442, %v1440, %v1437
        %v1444 = vadd.f32 %v1315, 1.0
        %v1445 = vlog2.pop %v1444
        %v1446 = vmul.f32 %v1445, 0.6931472
        %v1447 = vmul.f32 -0.5, %v1315
        %v1448 = vadd.f32 %v1447, 1.0
        %v1449 = vmul.f32 %v1448, %v1315
        %v1450 = vand.u32 2147483647, %v1315
        %vm1451 = vcmp.lt.f32.partialorder %v1450, 0.0004427343
        %v1452 = vsel %vm1451, %v1449, %v1446
        %v1453 = vadd.f32 %v1317, 1.0
        %v1454 = vlog2.pop %v1453
        %v1455 = vmul.f32 %v1454, 0.6931472
        %v1456 = vmul.f32 -0.5, %v1317
        %v1457 = vadd.f32 %v1456, 1.0
        %v1458 = vmul.f32 %v1457, %v1317
        %v1459 = vand.u32 2147483647, %v1317
        %vm1460 = vcmp.lt.f32.partialorder %v1459, 0.0004427343
        %v1461 = vsel %vm1460, %v1458, %v1455
        %v1462 = vadd.f32 %v1238, %v1326
        %v1463 = vadd.f32 %v1239, %v1335
        %v1464 = vadd.f32 %v1240, %v1344
        %v1465 = vadd.f32 %v1241, %v1353
        %v1466 = vadd.f32 %v1242, %v1362
        %v1467 = vadd.f32 %v1243, %v1371
        %v1468 = vadd.f32 %v1244, %v1380
        %v1469 = vadd.f32 %v1245, %v1389
        %v1470 = vadd.f32 %v1246, %v1398
        %v1471 = vadd.f32 %v1247, %v1407
        %v1472 = vadd.f32 %v1248, %v1416
        %v1473 = vadd.f32 %v1249, %v1425
        %v1474 = vadd.f32 %v1250, %v1434
        %v1475 = vadd.f32 %v1251, %v1443
        %v1476 = vadd.f32 %v1252, %v1452
        %v1477 = vadd.f32 %v1253, %v1461
        %v1478 = vsub.f32 0.6931472, %v1046
        %v1479 = vsub.f32 0.6931472, %v1047
        %v1480 = vsub.f32 0.6931472, %v1048
        %v1481 = vsub.f32 0.6931472, %v1049
        %v1482 = vsub.f32 0.6931472, %v1050
        %v1483 = vsub.f32 0.6931472, %v1051
        %v1484 = vsub.f32 0.6931472, %v1052
        %v1485 = vsub.f32 0.6931472, %v1053
        %v1486 = vsub.f32 0.6931472, %v1054
        %v1487 = vsub.f32 0.6931472, %v1055
        %v1488 = vsub.f32 0.6931472, %v1056
        %v1489 = vsub.f32 0.6931472, %v1057
        %v1490 = vsub.f32 0.6931472, %v1058
        %v1491 = vsub.f32 0.6931472, %v1059
        %v1492 = vsub.f32 0.6931472, %v1060
        %v1493 = vsub.f32 0.6931472, %v1061
        %v1494 = vsub.f32 %v1478, %v1462
        %v1495 = vsub.f32 %v1479, %v1463
        %v1496 = vsub.f32 %v1480, %v1464
        %v1497 = vsub.f32 %v1481, %v1465
        %v1498 = vsub.f32 %v1482, %v1466
        %v1499 = vsub.f32 %v1483, %v1467
        %v1500 = vsub.f32 %v1484, %v1468
        %v1501 = vsub.f32 %v1485, %v1469
        %v1502 = vsub.f32 %v1486, %v1470
        %v1503 = vsub.f32 %v1487, %v1471
        %v1504 = vsub.f32 %v1488, %v1472
        %v1505 = vsub.f32 %v1489, %v1473
        %v1506 = vsub.f32 %v1490, %v1474
        %v1507 = vsub.f32 %v1491, %v1475
        %v1508 = vsub.f32 %v1492, %v1476
        %v1509 = vsub.f32 %v1493, %v1477
        %v1510 = vmul.f32 %v1494, 2.0
        %v1511 = vmul.f32 %v1495, 2.0
        %v1512 = vmul.f32 %v1496, 2.0
        %v1513 = vmul.f32 %v1497, 2.0
        %v1514 = vmul.f32 %v1498, 2.0
        %v1515 = vmul.f32 %v1499, 2.0
        %v1516 = vmul.f32 %v1500, 2.0
        %v1517 = vmul.f32 %v1501, 2.0
        %v1518 = vmul.f32 %v1502, 2.0
        %v1519 = vmul.f32 %v1503, 2.0
        %v1520 = vmul.f32 %v1504, 2.0
        %v1521 = vmul.f32 %v1505, 2.0
        %v1522 = vmul.f32 %v1506, 2.0
        %v1523 = vmul.f32 %v1507, 2.0
        %v1524 = vmul.f32 %v1508, 2.0
        %v1525 = vmul.f32 %v1509, 2.0
        %v1526 = vsub.f32 %v1190, %v1510
        %v1527 = vsub.f32 %v1191, %v1511
        %v1528 = vsub.f32 %v1192, %v1512
        %v1529 = vsub.f32 %v1193, %v1513
        %v1530 = vsub.f32 %v1194, %v1514
        %v1531 = vsub.f32 %v1195, %v1515
        %v1532 = vsub.f32 %v1196, %v1516
        %v1533 = vsub.f32 %v1197, %v1517
        %v1534 = vsub.f32 %v1198, %v1518
        %v1535 = vsub.f32 %v1199, %v1519
        %v1536 = vsub.f32 %v1200, %v1520
        %v1537 = vsub.f32 %v1201, %v1521
        %v1538 = vsub.f32 %v1202, %v1522
        %v1539 = vsub.f32 %v1203, %v1523
        %v1540 = vsub.f32 %v1204, %v1524
        %v1541 = vsub.f32 %v1205, %v1525
        %vm1542 = vcmask 64512
        %v1543 = vsel %vm1542, %v1526, 0.0
        %1544 = vadd.xlane.f32.xlu0 %v1543
        %v1545 = vpop.xlane.xlu0 %1544
        %v1546 = vsel %vm1542, %v1527, 0.0
        %1547 = vadd.xlane.f32.xlu0 %v1546
        %v1548 = vpop.xlane.xlu0 %1547
        %v1549 = vsel %vm1542, %v1528, 0.0
        %1550 = vadd.xlane.f32.xlu0 %v1549
        %v1551 = vpop.xlane.xlu0 %1550
        %v1552 = vsel %vm1542, %v1529, 0.0
        %1553 = vadd.xlane.f32.xlu0 %v1552
        %v1554 = vpop.xlane.xlu0 %1553
        %v1555 = vsel %vm1542, %v1530, 0.0
        %1556 = vadd.xlane.f32.xlu0 %v1555
        %v1557 = vpop.xlane.xlu0 %1556
        %v1558 = vsel %vm1542, %v1531, 0.0
        %1559 = vadd.xlane.f32.xlu0 %v1558
        %v1560 = vpop.xlane.xlu0 %1559
        %v1561 = vsel %vm1542, %v1532, 0.0
        %1562 = vadd.xlane.f32.xlu0 %v1561
        %v1563 = vpop.xlane.xlu0 %1562
        %v1564 = vsel %vm1542, %v1533, 0.0
        %1565 = vadd.xlane.f32.xlu0 %v1564
        %v1566 = vpop.xlane.xlu0 %1565
        %v1567 = vsel %vm1542, %v1534, 0.0
        %1568 = vadd.xlane.f32.xlu0 %v1567
        %v1569 = vpop.xlane.xlu0 %1568
        %v1570 = vsel %vm1542, %v1535, 0.0
        %1571 = vadd.xlane.f32.xlu0 %v1570
        %v1572 = vpop.xlane.xlu0 %1571
        %v1573 = vsel %vm1542, %v1536, 0.0
        %1574 = vadd.xlane.f32.xlu0 %v1573
        %v1575 = vpop.xlane.xlu0 %1574
        %v1576 = vsel %vm1542, %v1537, 0.0
        %1577 = vadd.xlane.f32.xlu0 %v1576
        %v1578 = vpop.xlane.xlu0 %1577
        %v1579 = vsel %vm1542, %v1538, 0.0
        %1580 = vadd.xlane.f32.xlu0 %v1579
        %v1581 = vpop.xlane.xlu0 %1580
        %v1582 = vsel %vm1542, %v1539, 0.0
        %1583 = vadd.xlane.f32.xlu0 %v1582
        %v1584 = vpop.xlane.xlu0 %1583
        %v1585 = vsel %vm1542, %v1540, 0.0
        %1586 = vadd.xlane.f32.xlu0 %v1585
        %v1587 = vpop.xlane.xlu0 %1586
        %v1588 = vsel %vm1542, %v1541, 0.0
        %1589 = vadd.xlane.f32.xlu0 %v1588
        %v1590 = vpop.xlane.xlu0 %1589
        %1591 = vst [vmem:[%s369] sm:$0xff] 0.0
        %1592 = vst [vmem:[%s369 + $0x8] sm:$0xff] 0.0
        %1593 = vst [vmem:[%s369 + $0x10] sm:$0xff] 0.0
        %1594 = vst [vmem:[%s369 + $0x18] sm:$0xff] 0.0
        %1595 = vst [vmem:[%s369 + $0x20] sm:$0xff] 0.0
        %1596 = vst [vmem:[%s369 + $0x28] sm:$0xff] 0.0
        %1597 = vst [vmem:[%s369 + $0x30] sm:$0xff] 0.0
        %1598 = vst [vmem:[%s369 + $0x38] sm:$0xff] 0.0
        %1599 = vst [vmem:[%s369 + $0x40] sm:$0xff] 0.0
        %1600 = vst [vmem:[%s369 + $0x48] sm:$0xff] 0.0
        %1601 = vst [vmem:[%s369 + $0x50] sm:$0xff] 0.0
        %1602 = vst [vmem:[%s369 + $0x58] sm:$0xff] 0.0
        %1603 = vst [vmem:[%s369 + $0x60] sm:$0xff] 0.0
        %1604 = vst [vmem:[%s369 + $0x68] sm:$0xff] 0.0
        %1605 = vst [vmem:[%s369 + $0x70] sm:$0xff] 0.0
        %1606 = vst [vmem:[%s369 + $0x78] sm:$0xff] 0.0
        %1607 = vst.msk [vmem:[%s369] sm:$0xff] %vm1542, %v1062
        %1608 = vst.msk [vmem:[%s369 + $0x8] sm:$0xff] %vm1542, %v1063
        %1609 = vst.msk [vmem:[%s369 + $0x10] sm:$0xff] %vm1542, %v1064
        %1610 = vst.msk [vmem:[%s369 + $0x18] sm:$0xff] %vm1542, %v1065
        %1611 = vst.msk [vmem:[%s369 + $0x20] sm:$0xff] %vm1542, %v1066
        %1612 = vst.msk [vmem:[%s369 + $0x28] sm:$0xff] %vm1542, %v1067
        %1613 = vst.msk [vmem:[%s369 + $0x30] sm:$0xff] %vm1542, %v1068
        %1614 = vst.msk [vmem:[%s369 + $0x38] sm:$0xff] %vm1542, %v1069
        %1615 = vst.msk [vmem:[%s369 + $0x40] sm:$0xff] %vm1542, %v1070
        %1616 = vst.msk [vmem:[%s369 + $0x48] sm:$0xff] %vm1542, %v1071
        %1617 = vst.msk [vmem:[%s369 + $0x50] sm:$0xff] %vm1542, %v1072
        %1618 = vst.msk [vmem:[%s369 + $0x58] sm:$0xff] %vm1542, %v1073
        %1619 = vst.msk [vmem:[%s369 + $0x60] sm:$0xff] %vm1542, %v1074
        %1620 = vst.msk [vmem:[%s369 + $0x68] sm:$0xff] %vm1542, %v1075
        %1621 = vst.msk [vmem:[%s369 + $0x70] sm:$0xff] %vm1542, %v1076
        %1622 = vst.msk [vmem:[%s369 + $0x78] sm:$0xff] %vm1542, %v1077
        %v1623 = vtanh.pop %v775
        %v1624 = vtanh.pop %v778
        %v1625 = vtanh.pop %v781
        %v1626 = vtanh.pop %v784
        %v1627 = vtanh.pop %v787
        %v1628 = vtanh.pop %v790
        %v1629 = vtanh.pop %v793
        %v1630 = vtanh.pop %v796
        %v1631 = vtanh.pop %v799
        %v1632 = vtanh.pop %v802
        %v1633 = vtanh.pop %v805
        %v1634 = vtanh.pop %v808
        %v1635 = vtanh.pop %v811
        %v1636 = vtanh.pop %v814
        %v1637 = vtanh.pop %v817
        %v1638 = vtanh.pop %v820
        %1655 = vrot.lane.b32.xlu0 %v1623, 8
        %v1656 = vpop.permute.xlu0 %1655
        %1657 = vrot.lane.b32.xlu0 %v1624, 8
        %v1658 = vpop.permute.xlu0 %1657
        %1659 = vrot.lane.b32.xlu0 %v1625, 8
        %v1660 = vpop.permute.xlu0 %1659
        %1661 = vrot.lane.b32.xlu0 %v1626, 8
        %v1662 = vpop.permute.xlu0 %1661
        %1663 = vrot.lane.b32.xlu0 %v1627, 8
        %v1664 = vpop.permute.xlu0 %1663
        %1665 = vrot.lane.b32.xlu0 %v1628, 8
        %v1666 = vpop.permute.xlu0 %1665
        %1667 = vrot.lane.b32.xlu0 %v1629, 8
        %v1668 = vpop.permute.xlu0 %1667
        %1669 = vrot.lane.b32.xlu0 %v1630, 8
        %v1670 = vpop.permute.xlu0 %1669
        %1671 = vrot.lane.b32.xlu0 %v1631, 8
        %v1672 = vpop.permute.xlu0 %1671
        %1673 = vrot.lane.b32.xlu0 %v1632, 8
        %v1674 = vpop.permute.xlu0 %1673
        %1675 = vrot.lane.b32.xlu0 %v1633, 8
        %v1676 = vpop.permute.xlu0 %1675
        %1677 = vrot.lane.b32.xlu0 %v1634, 8
        %v1678 = vpop.permute.xlu0 %1677
        %1679 = vrot.lane.b32.xlu0 %v1635, 8
        %v1680 = vpop.permute.xlu0 %1679
        %1681 = vrot.lane.b32.xlu0 %v1636, 8
        %v1682 = vpop.permute.xlu0 %1681
        %1683 = vrot.lane.b32.xlu0 %v1637, 8
        %v1684 = vpop.permute.xlu0 %1683
        %1685 = vrot.lane.b32.xlu0 %v1638, 8
        %v1686 = vpop.permute.xlu0 %1685
        %vm1703 = vcmask 130112
        %1704 = vst.msk [vmem:[%s369] sm:$0xff] %vm1703, %v1656
        %1705 = vst.msk [vmem:[%s369 + $0x8] sm:$0xff] %vm1703, %v1658
        %1706 = vst.msk [vmem:[%s369 + $0x10] sm:$0xff] %vm1703, %v1660
        %1707 = vst.msk [vmem:[%s369 + $0x18] sm:$0xff] %vm1703, %v1662
        %1708 = vst.msk [vmem:[%s369 + $0x20] sm:$0xff] %vm1703, %v1664
        %1709 = vst.msk [vmem:[%s369 + $0x28] sm:$0xff] %vm1703, %v1666
        %1710 = vst.msk [vmem:[%s369 + $0x30] sm:$0xff] %vm1703, %v1668
        %1711 = vst.msk [vmem:[%s369 + $0x38] sm:$0xff] %vm1703, %v1670
        %1712 = vst.msk [vmem:[%s369 + $0x40] sm:$0xff] %vm1703, %v1672
        %1713 = vst.msk [vmem:[%s369 + $0x48] sm:$0xff] %vm1703, %v1674
        %1714 = vst.msk [vmem:[%s369 + $0x50] sm:$0xff] %vm1703, %v1676
        %1715 = vst.msk [vmem:[%s369 + $0x58] sm:$0xff] %vm1703, %v1678
        %1716 = vst.msk [vmem:[%s369 + $0x60] sm:$0xff] %vm1703, %v1680
        %1717 = vst.msk [vmem:[%s369 + $0x68] sm:$0xff] %vm1703, %v1682
        %1718 = vst.msk [vmem:[%s369 + $0x70] sm:$0xff] %vm1703, %v1684
        %1719 = vst.msk [vmem:[%s369 + $0x78] sm:$0xff] %vm1703, %v1686
        %vm1720 = vcmask 138368
        %1721 = vst.msk [vmem:[%s369] sm:$0xff] %vm1720, %v1545
        %1722 = vst.msk [vmem:[%s369 + $0x8] sm:$0xff] %vm1720, %v1548
        %1723 = vst.msk [vmem:[%s369 + $0x10] sm:$0xff] %vm1720, %v1551
        %1724 = vst.msk [vmem:[%s369 + $0x18] sm:$0xff] %vm1720, %v1554
        %1725 = vst.msk [vmem:[%s369 + $0x20] sm:$0xff] %vm1720, %v1557
        %1726 = vst.msk [vmem:[%s369 + $0x28] sm:$0xff] %vm1720, %v1560
        %1727 = vst.msk [vmem:[%s369 + $0x30] sm:$0xff] %vm1720, %v1563
        %1728 = vst.msk [vmem:[%s369 + $0x38] sm:$0xff] %vm1720, %v1566
        %1729 = vst.msk [vmem:[%s369 + $0x40] sm:$0xff] %vm1720, %v1569
        %1730 = vst.msk [vmem:[%s369 + $0x48] sm:$0xff] %vm1720, %v1572
        %1731 = vst.msk [vmem:[%s369 + $0x50] sm:$0xff] %vm1720, %v1575
        %1732 = vst.msk [vmem:[%s369 + $0x58] sm:$0xff] %vm1720, %v1578
        %1733 = vst.msk [vmem:[%s369 + $0x60] sm:$0xff] %vm1720, %v1581
        %1734 = vst.msk [vmem:[%s369 + $0x68] sm:$0xff] %vm1720, %v1584
        %1735 = vst.msk [vmem:[%s369 + $0x70] sm:$0xff] %vm1720, %v1587
        %1736 = vst.msk [vmem:[%s369 + $0x78] sm:$0xff] %vm1720, %v1590
        %s1737 = sand.u32 %s252, 1
        %s1738 = scalar_lea.sflag [#allocation3], %s1737
        %s1739 = sand.u32 %s252, 1
        %s1740 = smul.addr %s1739, 128
        %s1741 = scalar_lea.vmem [#allocation2], %s1740
        // Predicated region
        $region61: #{tpu_custom_call.1} parent=59 // pred_check
          %p1742 = pneg %p262
        $region62: #{tpu_custom_call.1} parent=59 // pred_check_branch
          %1744 = sbr.rel (%p1742) target = $region64
        $region63: #{tpu_custom_call.1} parent=59 // pred_region
          %s1745 = smul.u32 16, %s24
          %1747 = vsyncadd %s1738, 0
          %s1748 = smul.addr %s1745, 8
          %s1749 = scalar_lea.hbm %s10, %s1748
          %s1750 = sshll.u32 %s1741, 4
          %s1751 = int_to_ptr.vmem [resolvable:$true] %s1750
          %s1752 = sshll.u32 %s1749, 4
          %s1753 = int_to_ptr.hbm [resolvable:$true] %s1752
          %1758 = dma.vmem_to_hbm [thread:$0]  %s1751, 2048, %s1753, %s1738, 128, 128, 8
        $region64: #{tpu_custom_call.1} parent=59 // pred_fallthru
          _
      $region60: #{tpu_custom_call.1} parent=5 // pred_fallthru
        _
      %p1759 = scmp.le.s32.totalorder 2, %s19
      // Predicated region
      $region65: #{tpu_custom_call.1} parent=5 // pred_check
        %p1760 = pneg %p1759
      $region66: #{tpu_custom_call.1} parent=5 // pred_check_branch
        %1762 = sbr.rel (%p1760) target = $region68
      $region67: #{tpu_custom_call.1} parent=5 // pred_region
        %s1763 = ssub.s32 %s19, 2
        // Predicated region
        $region69: #{tpu_custom_call.1} parent=67 // pred_check
          %p1764 = pneg %p268
        $region70: #{tpu_custom_call.1} parent=67 // pred_check_branch
          %1766 = sbr.rel (%p1764) target = $region72
        $region71: #{tpu_custom_call.1} parent=67 // pred_region
          %s1767 = sand.u32 %s253, 1
          %s1768 = scalar_lea.sflag [#allocation3], %s1767
          %s1769 = sand.u32 %s253, 1
          %s1770 = smul.addr %s1769, 128
          %s1771 = scalar_lea.vmem [#allocation2], %s1770
          %1773 = dma.done %s1768, 2048
        $region72: #{tpu_custom_call.1} parent=67 // pred_fallthru
          _
      $region68: #{tpu_custom_call.1} parent=5 // pred_fallthru
        _
    $region6: #{tpu_custom_call.1} parent=1 // loop_footer
      %s23 = sadd.s32 1, %s19
    $region7: #{tpu_custom_call.1} parent=1 // loop_footer_branch
      %18 = sbr.rel target = $region3
    $region8: #{tpu_custom_call.1} parent=1 // loop_exit
      _
    %1774 = vsyncpa [#allocation3], 1
    %s1775 = scalar_lea.sflag [#allocation3], 1
    %1776 = vsyncpa %s1775, 1

</llo_original>
